<compile_context>
chip_gen: v6e
topology: v6e:2x2x1
jax: 0.10.0
libtpu: 0.0.40
codegen_flags: <defaults>
</compile_context>

<pallas_src>
import numpy as np

import jax
import jax.numpy as jnp
from jax.experimental import pallas as pl
from jax.experimental.pallas import tpu as pltpu

# ----------------------------- model dims (small) ---------------------------
B = 2      # batch (demo)
S = 8      # fixation sequence length
F = 16     # eyetracking features per fixation (input_size)
D = 32     # model hidden dim
H = 64     # FFN hidden dim
LN_EPS = 1e-5
LANE = 128

# --------------------- packed-parameter slab layouts ------------------------
# main weight slab (W_ROWS, 128), bf16; all row offsets multiples of 16
R_WIN = 0              # (F, D)    input projection
R_WO = R_WIN + F       # 16:  (128, D) attention output projection, zero-row padded
R_W1 = R_WO + LANE     # 144: (D, H)   FFN in
R_W2 = R_W1 + D        # 176: (H, D)   FFN out
R_WC = R_W2 + H        # 240: (D, 128) classifier head, zero-padded to 128 lanes
W_ROWS = R_WC + D      # 272

# QKV slab (QKV_ROWS, 384), bf16: [Wq | Wk | Wv], each padded to a 128-lane group;
# row D holds the fused bias [bq | bk | bv] in the same lane groups.
QKV_ROWS = 48

# bias slab (B_ROWS, 128), f32; one row per bias / LN parameter vector
(ROW_B_IN, ROW_B_O, ROW_G1, ROW_BE1, ROW_B1, ROW_B2, ROW_G2, ROW_BE2, ROW_B_C) = range(9)
B_ROWS = 16


def _layernorm(x, gamma, beta):
    # LayerNorm over last dim, PyTorch semantics (biased variance, eps inside sqrt)
    mu = jnp.mean(x, axis=-1, keepdims=True)
    var = jnp.mean((x - mu) * (x - mu), axis=-1, keepdims=True)
    inv = jax.lax.rsqrt(var + LN_EPS)
    return (x - mu) * inv * gamma + beta


def _encoder_kernel(x_ref, w_ref, qkv_ref, b_ref, mask_ref, pool_ref, o_ref):
    """One grid step processes one tile of TB samples (TB*S rows)."""
    x = x_ref[...]                                                        # (M, F) f32

    # ---- bf16 weight slabs: upcast once, matmuls run / accumulate in f32 ----
    w_in = w_ref[pl.ds(R_WIN, F), pl.ds(0, D)].astype(jnp.float32)       # (F, D)
    wo = w_ref[pl.ds(R_WO, LANE), pl.ds(0, D)].astype(jnp.float32)       # (128, D), rows >= D zero
    w1 = w_ref[pl.ds(R_W1, D), pl.ds(0, H)].astype(jnp.float32)          # (D, H)
    w2 = w_ref[pl.ds(R_W2, H), pl.ds(0, D)].astype(jnp.float32)          # (H, D)
    wc = w_ref[pl.ds(R_WC, D), :].astype(jnp.float32)                    # (D, 128) padded head
    wqkv = qkv_ref[pl.ds(0, D), :].astype(jnp.float32)                   # (D, 384)
    bqkv = qkv_ref[pl.ds(D, 1), :].astype(jnp.float32)                   # (1, 384)

    b_in = b_ref[pl.ds(ROW_B_IN, 1), pl.ds(0, D)]
    bo = b_ref[pl.ds(ROW_B_O, 1), pl.ds(0, D)]
    g1 = b_ref[pl.ds(ROW_G1, 1), pl.ds(0, D)]
    be1 = b_ref[pl.ds(ROW_BE1, 1), pl.ds(0, D)]
    b1 = b_ref[pl.ds(ROW_B1, 1), pl.ds(0, H)]
    b2 = b_ref[pl.ds(ROW_B2, 1), pl.ds(0, D)]
    g2 = b_ref[pl.ds(ROW_G2, 1), pl.ds(0, D)]
    be2 = b_ref[pl.ds(ROW_BE2, 1), pl.ds(0, D)]
    bc = b_ref[pl.ds(ROW_B_C, 1), :]                                     # (1, 128)

    # ---- input projection for all TB*S fixation rows at once ----
    h = jnp.dot(x, w_in, preferred_element_type=jnp.float32) + b_in      # (M, D)

    # ---- fused Q/K/V; each projection padded to a full 128-lane group so the
    #      slices below are vreg-aligned (lanes >= D are exactly zero) ----
    qkv = jnp.dot(h, wqkv, preferred_element_type=jnp.float32) + bqkv    # (M, 384)
    q = qkv[:, 0:LANE]
    k = qkv[:, LANE:2 * LANE]
    v = qkv[:, 2 * LANE:3 * LANE]

    # ---- single-head attention inside the batch tile (block-diagonal mask) --
    scale = 1.0 / jnp.sqrt(jnp.float32(D))
    scores = jax.lax.dot_general(q, k, (((1,), (1,)), ((), ())),
                                 preferred_element_type=jnp.float32)     # (M, M)
    scores = scores * scale + mask_ref[...]                              # additive mask
    scores = scores - jnp.max(scores, axis=-1, keepdims=True)
    p = jnp.exp(scores)
    p = p / jnp.sum(p, axis=-1, keepdims=True)                           # exact softmax

    attn = jnp.dot(p, v, preferred_element_type=jnp.float32)             # (M, 128), lanes >= D zero
    attn = jnp.dot(attn, wo, preferred_element_type=jnp.float32) + bo    # (M, D)

    # post-LN residual 1
    h = _layernorm(h + attn, g1, be1)

    # ---- feed-forward ----
    ff = jnp.dot(h, w1, preferred_element_type=jnp.float32) + b1         # (M, H)
    ff = jnp.maximum(ff, 0.0)                                            # ReLU
    ff = jnp.dot(ff, w2, preferred_element_type=jnp.float32) + b2        # (M, D)

    # post-LN residual 2
    h = _layernorm(h + ff, g2, be2)

    # ---- per-sample mean pool via a precomputed pooling matrix ----
    pooled = jnp.dot(pool_ref[...], h, preferred_element_type=jnp.float32)   # (TB, D)

    # ---- lane-dense classification head (wc zero-padded to 128 lanes) ----
    o_ref[...] = jnp.dot(pooled, wc, preferred_element_type=jnp.float32) + bc


def pack_params(p):
    """Pack the 20 parameter arrays into 3 slabs (main weights, QKV, biases).

    Called ONCE per weight set (hoisted out of the per-forward path).
    """
    def put(slab, r0, mat, c0=0):
        r, c = mat.shape
        return slab.at[r0:r0 + r, c0:c0 + c].set(mat)

    w = jnp.zeros((W_ROWS, LANE), jnp.float32)
    w = put(w, R_WIN, p["w_in"])
    w = put(w, R_WO, p["wo"])            # (D, D) in the first D rows of the 128-row region
    w = put(w, R_W1, p["w1"])
    w = put(w, R_W2, p["w2"])
    w = put(w, R_WC, p["wc"])            # (D, 1) -> lane 0
    w_slab = w.astype(jnp.bfloat16)

    qkv = jnp.zeros((QKV_ROWS, 3 * LANE), jnp.float32)
    qkv = put(qkv, 0, p["wq"], 0)
    qkv = put(qkv, 0, p["wk"], LANE)
    qkv = put(qkv, 0, p["wv"], 2 * LANE)
    qkv = put(qkv, D, p["bq"], 0)
    qkv = put(qkv, D, p["bk"], LANE)
    qkv = put(qkv, D, p["bv"], 2 * LANE)
    qkv_slab = qkv.astype(jnp.bfloat16)

    b = jnp.zeros((B_ROWS, LANE), jnp.float32)
    for row, vec in [
        (ROW_B_IN, p["b_in"]), (ROW_B_O, p["bo"]),
        (ROW_G1, p["g1"]), (ROW_BE1, p["be1"]),
        (ROW_B1, p["b1"]), (ROW_B2, p["b2"]),
        (ROW_G2, p["g2"]), (ROW_BE2, p["be2"]),
        (ROW_B_C, p["bc"]),
    ]:
        b = put(b, row, vec)
    return w_slab, qkv_slab, b


def _forward_impl(x, w_slab, qkv_slab, b_slab, mask, pool):
    """x: (B, S, F) f32 -> logits (B, 1) f32.  Jitted; all shapes static."""
    b, s, f = x.shape
    tb = pool.shape[0]                       # samples per tile
    rows = pool.shape[1]                     # tb * s rows per tile
    b_pad = ((b + tb - 1) // tb) * tb
    n_tiles = b_pad // tb

    x_pad = jnp.pad(x, ((0, b_pad - b), (0, 0), (0, 0)))
    x_flat = x_pad.reshape(b_pad * s, f)     # batch folded into sublanes

    out = pl.pallas_call(
        _encoder_kernel,
        out_shape=jax.ShapeDtypeStruct((b_pad, LANE), jnp.float32),
        grid=(n_tiles,),
        in_specs=[
            pl.BlockSpec((rows, f), lambda i: (i, 0)),                # per-tile activations
            pl.BlockSpec((W_ROWS, LANE), lambda i: (0, 0)),           # resident weight slab
            pl.BlockSpec((QKV_ROWS, 3 * LANE), lambda i: (0, 0)),     # resident QKV slab
            pl.BlockSpec((B_ROWS, LANE), lambda i: (0, 0)),           # resident bias slab
            pl.BlockSpec((rows, rows), lambda i: (0, 0)),             # block-diagonal mask
            pl.BlockSpec((tb, rows), lambda i: (0, 0)),               # mean-pool matrix
        ],
        out_specs=pl.BlockSpec((tb, LANE), lambda i: (i, 0)),         # lane-dense logits tile
        compiler_params=pltpu.CompilerParams(dimension_semantics=("parallel",)),
    )(x_flat, w_slab, qkv_slab, b_slab, mask, pool)

    return out[:b, :1]


_jitted_forward = jax.jit(_forward_impl)


def make_forward_fn(params, *, seq, feat, tile_batch=None):
    """Pack parameters / constants once; return a jitted forward(x) callable."""
    del feat  # shapes are taken from x at call time
    if tile_batch is None:
        tile_batch = max(8, LANE // seq)          # aim for TB*S ~= 128 rows per tile
        tile_batch = ((tile_batch + 7) // 8) * 8  # output tile sublane-aligned
    rows = tile_batch * seq
    assert rows % 8 == 0 and tile_batch % 8 == 0

    w_slab, qkv_slab, b_slab = pack_params(params)

    # Block-diagonal additive mask and mean-pool matrix: compile-time constants
    # of the tile layout, built once on the host (no in-kernel iota/select work).
    grp = np.arange(rows) // seq
    mask = jnp.asarray(np.where(grp[:, None] == grp[None, :], 0.0, -1e30),
                       dtype=jnp.float32)                                  # (rows, rows)
    pool = jnp.asarray(np.where(np.arange(tile_batch)[:, None] == grp[None, :],
                                1.0 / seq, 0.0), dtype=jnp.float32)        # (tb, rows)

    def forward(x):
        return _jitted_forward(x, w_slab, qkv_slab, b_slab, mask, pool)

    return forward


def init_params(key):
    """Deterministic parameter init (shapes implied by the concrete forward).

    Weights are rounded to bf16-representable values so the bf16 packed slab
    is a lossless storage format (the f32 reference then matches exactly).
    """
    ks = jax.random.split(key, 8)

    def dense(k, fan_in, shape):
        w = jax.random.normal(k, shape, jnp.float32) / jnp.sqrt(jnp.float32(fan_in))
        return w.astype(jnp.bfloat16).astype(jnp.float32)

    params = {
        "w_in": dense(ks[0], F, (F, D)), "b_in": jnp.zeros((1, D), jnp.float32),
        "wq":   dense(ks[1], D, (D, D)), "bq":   jnp.zeros((1, D), jnp.float32),
        "wk":   dense(ks[2], D, (D, D)), "bk":   jnp.zeros((1, D), jnp.float32),
        "wv":   dense(ks[3], D, (D, D)), "bv":   jnp.zeros((1, D), jnp.float32),
        "wo":   dense(ks[4], D, (D, D)), "bo":   jnp.zeros((1, D), jnp.float32),
        "g1":   jnp.ones((1, D), jnp.float32), "be1": jnp.zeros((1, D), jnp.float32),
        "w1":   dense(ks[5], D, (D, H)), "b1":   jnp.zeros((1, H), jnp.float32),
        "w2":   dense(ks[6], H, (H, D)), "b2":   jnp.zeros((1, D), jnp.float32),
        "g2":   jnp.ones((1, D), jnp.float32), "be2": jnp.zeros((1, D), jnp.float32),
        "wc":   dense(ks[7], D, (D, 1)), "bc":   jnp.zeros((1, 1), jnp.float32),
    }
    return params


def reference_forward(x, p):
    """Pure-JAX f32 reference of the same forward (sanity check)."""
    def ln(h, g, b):
        mu = jnp.mean(h, axis=-1, keepdims=True)
        var = jnp.mean((h - mu) ** 2, axis=-1, keepdims=True)
        return (h - mu) / jnp.sqrt(var + LN_EPS) * g + b

    h = x @ p["w_in"] + p["b_in"]
    q = h @ p["wq"] + p["bq"]
    k = h @ p["wk"] + p["bk"]
    v = h @ p["wv"] + p["bv"]
    s = jnp.einsum("bqd,bkd->bqk", q, k) / jnp.sqrt(jnp.float32(D))
    a = jax.nn.softmax(s, axis=-1)
    attn = jnp.einsum("bqk,bkd->bqd", a, v) @ p["wo"] + p["bo"]
    h = ln(h + attn, p["g1"], p["be1"])
    ff = jax.nn.relu(h @ p["w1"] + p["b1"]) @ p["w2"] + p["b2"]
    h = ln(h + ff, p["g2"], p["be2"])
    pooled = jnp.mean(h, axis=1)
    return pooled @ p["wc"] + p["bc"]


if __name__ == "__main__":
    key = jax.random.PRNGKey(0)
    k_x, k_p = jax.random.split(key)

    x = jax.random.normal(k_x, (B, S, F), jnp.float32)
    params = init_params(k_p)

    # Packing / mask / pool construction happen once here, not per call.
    forward = make_forward_fn(params, seq=S, feat=F)

    logits = jax.block_until_ready(forward(x))
    ref = reference_forward(x, params)

    assert logits.shape == (B, 1), logits.shape
    # Weights are bf16-exact and the softmax is exact, so the only kernel-vs-
    # reference differences are MXU f32 matmul pass / accumulation-order
    # differences between Mosaic and XLA; 5e-3 is comfortably above that.
    assert jnp.allclose(logits, ref, atol=5e-3, rtol=5e-3), (logits, ref)

    print("KERNEL_OK")
</pallas_src>

<mosaic_0001>
module attributes {stable_mosaic.version = 11 : i64} {
  func.func @_encoder_kernel(%arg0: i32, %arg1: memref<128x16xf32, #tpu.memory_space<vmem>>, %arg2: memref<272x128xbf16, #tpu.memory_space<vmem>>, %arg3: memref<48x384xbf16, #tpu.memory_space<vmem>>, %arg4: memref<16x128xf32, #tpu.memory_space<vmem>>, %arg5: memref<128x128xf32, #tpu.memory_space<vmem>>, %arg6: memref<16x128xf32, #tpu.memory_space<vmem>>, %arg7: memref<16x128xf32, #tpu.memory_space<vmem>>) attributes {dimension_semantics = [#tpu.dimension_semantics<parallel>], iteration_bounds = array<i64: 1>, scalar_prefetch = 0 : i64, scratch_operands = 0 : i64, tpu.core_type = #tpu.core_type<tc>, window_params = [{transform_indices = @transform_0, window_bounds = array<i64: 128, 16>}, {pipeline_mode = #tpu.pipeline_mode<synchronous>, transform_indices = @transform_1, window_bounds = array<i64: 272, 128>}, {pipeline_mode = #tpu.pipeline_mode<synchronous>, transform_indices = @transform_2, window_bounds = array<i64: 48, 384>}, {pipeline_mode = #tpu.pipeline_mode<synchronous>, transform_indices = @transform_3, window_bounds = array<i64: 16, 128>}, {pipeline_mode = #tpu.pipeline_mode<synchronous>, transform_indices = @transform_4, window_bounds = array<i64: 128, 128>}, {pipeline_mode = #tpu.pipeline_mode<synchronous>, transform_indices = @transform_5, window_bounds = array<i64: 16, 128>}, {transform_indices = @transform_6, window_bounds = array<i64: 16, 128>}]} {
    %c0 = arith.constant 0 : index
    %c0_0 = arith.constant 0 : index
    %0 = vector.load %arg1[%c0, %c0_0] : memref<128x16xf32, #tpu.memory_space<vmem>>, vector<128x16xf32>
    %c0_1 = arith.constant 0 : index
    %c0_2 = arith.constant 0 : index
    %1 = vector.load %arg2[%c0_1, %c0_2] : memref<272x128xbf16, #tpu.memory_space<vmem>>, vector<16x32xbf16>
    %2 = arith.extf %1 : vector<16x32xbf16> to vector<16x32xf32>
    %c16 = arith.constant 16 : index
    %c0_3 = arith.constant 0 : index
    %3 = vector.load %arg2[%c16, %c0_3] : memref<272x128xbf16, #tpu.memory_space<vmem>>, vector<128x32xbf16>
    %4 = arith.extf %3 : vector<128x32xbf16> to vector<128x32xf32>
    %c144 = arith.constant 144 : index
    %c0_4 = arith.constant 0 : index
    %5 = vector.load %arg2[%c144, %c0_4] : memref<272x128xbf16, #tpu.memory_space<vmem>>, vector<32x64xbf16>
    %6 = arith.extf %5 : vector<32x64xbf16> to vector<32x64xf32>
    %c176 = arith.constant 176 : index
    %c0_5 = arith.constant 0 : index
    %7 = vector.load %arg2[%c176, %c0_5] : memref<272x128xbf16, #tpu.memory_space<vmem>>, vector<64x32xbf16>
    %8 = arith.extf %7 : vector<64x32xbf16> to vector<64x32xf32>
    %c240 = arith.constant 240 : index
    %c0_6 = arith.constant 0 : index
    %9 = vector.load %arg2[%c240, %c0_6] : memref<272x128xbf16, #tpu.memory_space<vmem>>, vector<32x128xbf16>
    %10 = arith.extf %9 : vector<32x128xbf16> to vector<32x128xf32>
    %c0_7 = arith.constant 0 : index
    %c0_8 = arith.constant 0 : index
    %11 = vector.load %arg3[%c0_7, %c0_8] : memref<48x384xbf16, #tpu.memory_space<vmem>>, vector<32x384xbf16>
    %12 = arith.extf %11 : vector<32x384xbf16> to vector<32x384xf32>
    %c32 = arith.constant 32 : index
    %c0_9 = arith.constant 0 : index
    %13 = vector.load %arg3[%c32, %c0_9] : memref<48x384xbf16, #tpu.memory_space<vmem>>, vector<1x384xbf16>
    %14 = arith.extf %13 : vector<1x384xbf16> to vector<1x384xf32>
    %c0_10 = arith.constant 0 : index
    %c0_11 = arith.constant 0 : index
    %15 = vector.load %arg4[%c0_10, %c0_11] : memref<16x128xf32, #tpu.memory_space<vmem>>, vector<1x32xf32>
    %c1 = arith.constant 1 : index
    %c0_12 = arith.constant 0 : index
    %16 = vector.load %arg4[%c1, %c0_12] : memref<16x128xf32, #tpu.memory_space<vmem>>, vector<1x32xf32>
    %c2 = arith.constant 2 : index
    %c0_13 = arith.constant 0 : index
    %17 = vector.load %arg4[%c2, %c0_13] : memref<16x128xf32, #tpu.memory_space<vmem>>, vector<1x32xf32>
    %c3 = arith.constant 3 : index
    %c0_14 = arith.constant 0 : index
    %18 = vector.load %arg4[%c3, %c0_14] : memref<16x128xf32, #tpu.memory_space<vmem>>, vector<1x32xf32>
    %c4 = arith.constant 4 : index
    %c0_15 = arith.constant 0 : index
    %19 = vector.load %arg4[%c4, %c0_15] : memref<16x128xf32, #tpu.memory_space<vmem>>, vector<1x64xf32>
    %c5 = arith.constant 5 : index
    %c0_16 = arith.constant 0 : index
    %20 = vector.load %arg4[%c5, %c0_16] : memref<16x128xf32, #tpu.memory_space<vmem>>, vector<1x32xf32>
    %c6 = arith.constant 6 : index
    %c0_17 = arith.constant 0 : index
    %21 = vector.load %arg4[%c6, %c0_17] : memref<16x128xf32, #tpu.memory_space<vmem>>, vector<1x32xf32>
    %c7 = arith.constant 7 : index
    %c0_18 = arith.constant 0 : index
    %22 = vector.load %arg4[%c7, %c0_18] : memref<16x128xf32, #tpu.memory_space<vmem>>, vector<1x32xf32>
    %c8 = arith.constant 8 : index
    %c0_19 = arith.constant 0 : index
    %23 = vector.load %arg4[%c8, %c0_19] : memref<16x128xf32, #tpu.memory_space<vmem>>, vector<1x128xf32>
    %cst = arith.constant dense<0.000000e+00> : vector<128x32xf32>
    %24 = tpu.matmul %0, %2, %cst {dimension_numbers = #tpu.dot_dimension_numbers<[1], [0], [0], [1], [0, 0, 1, 1], [], []>} : vector<128x16xf32>, vector<16x32xf32>, vector<128x32xf32> -> vector<128x32xf32>
    %25 = vector.broadcast %15 : vector<1x32xf32> to vector<128x32xf32>
    %26 = arith.addf %24, %25 : vector<128x32xf32>
    %cst_20 = arith.constant dense<0.000000e+00> : vector<128x384xf32>
    %27 = tpu.matmul %26, %12, %cst_20 {dimension_numbers = #tpu.dot_dimension_numbers<[1], [0], [0], [1], [0, 0, 1, 1], [], []>} : vector<128x32xf32>, vector<32x384xf32>, vector<128x384xf32> -> vector<128x384xf32>
    %28 = vector.broadcast %14 : vector<1x384xf32> to vector<128x384xf32>
    %29 = arith.addf %27, %28 : vector<128x384xf32>
    %30 = vector.extract_strided_slice %29 {offsets = [0, 0], sizes = [128, 128], strides = [1, 1]} : vector<128x384xf32> to vector<128x128xf32>
    %31 = vector.extract_strided_slice %29 {offsets = [0, 128], sizes = [128, 128], strides = [1, 1]} : vector<128x384xf32> to vector<128x128xf32>
    %32 = vector.extract_strided_slice %29 {offsets = [0, 256], sizes = [128, 128], strides = [1, 1]} : vector<128x384xf32> to vector<128x128xf32>
    %cst_21 = arith.constant 3.200000e+01 : f32
    %33 = math.sqrt %cst_21 : f32
    %cst_22 = arith.constant 1.000000e+00 : f32
    %34 = arith.divf %cst_22, %33 : f32
    %cst_23 = arith.constant dense<0.000000e+00> : vector<128x128xf32>
    %35 = tpu.matmul %30, %31, %cst_23 {dimension_numbers = #tpu.dot_dimension_numbers<[1], [1], [0], [0], [0, 0, 1, 0], [], []>} : vector<128x128xf32>, vector<128x128xf32>, vector<128x128xf32> -> vector<128x128xf32>
    %36 = vector.broadcast %34 : f32 to vector<128x128xf32>
    %37 = arith.mulf %35, %36 : vector<128x128xf32>
    %c0_24 = arith.constant 0 : index
    %c0_25 = arith.constant 0 : index
    %38 = vector.load %arg5[%c0_24, %c0_25] : memref<128x128xf32, #tpu.memory_space<vmem>>, vector<128x128xf32>
    %39 = arith.addf %37, %38 : vector<128x128xf32>
    %cst_26 = arith.constant dense<0xFF800000> : vector<128xf32>
    %40 = vector.multi_reduction <maximumf>, %39, %cst_26 [1] : vector<128x128xf32> to vector<128xf32>
    %41 = vector.shape_cast %40 : vector<128xf32> to vector<128x1xf32>
    %42 = vector.broadcast %41 : vector<128x1xf32> to vector<128x128xf32>
    %43 = arith.subf %39, %42 : vector<128x128xf32>
    %44 = math.exp %43 : vector<128x128xf32>
    %cst_27 = arith.constant dense<0.000000e+00> : vector<128xf32>
    %45 = vector.multi_reduction <add>, %44, %cst_27 [1] : vector<128x128xf32> to vector<128xf32>
    %46 = vector.shape_cast %45 : vector<128xf32> to vector<128x1xf32>
    %47 = vector.broadcast %46 : vector<128x1xf32> to vector<128x128xf32>
    %48 = arith.divf %44, %47 : vector<128x128xf32>
    %cst_28 = arith.constant dense<0.000000e+00> : vector<128x128xf32>
    %49 = tpu.matmul %48, %32, %cst_28 {dimension_numbers = #tpu.dot_dimension_numbers<[1], [0], [0], [1], [0, 0, 1, 1], [], []>} : vector<128x128xf32>, vector<128x128xf32>, vector<128x128xf32> -> vector<128x128xf32>
    %cst_29 = arith.constant dense<0.000000e+00> : vector<128x32xf32>
    %50 = tpu.matmul %49, %4, %cst_29 {dimension_numbers = #tpu.dot_dimension_numbers<[1], [0], [0], [1], [0, 0, 1, 1], [], []>} : vector<128x128xf32>, vector<128x32xf32>, vector<128x32xf32> -> vector<128x32xf32>
    %51 = vector.broadcast %16 : vector<1x32xf32> to vector<128x32xf32>
    %52 = arith.addf %50, %51 : vector<128x32xf32>
    %53 = arith.addf %26, %52 : vector<128x32xf32>
    %cst_30 = arith.constant dense<0.000000e+00> : vector<128xf32>
    %54 = vector.multi_reduction <add>, %53, %cst_30 [1] : vector<128x32xf32> to vector<128xf32>
    %55 = vector.shape_cast %54 : vector<128xf32> to vector<128x1xf32>
    %cst_31 = arith.constant 3.200000e+01 : f32
    %56 = vector.broadcast %cst_31 : f32 to vector<128x1xf32>
    %57 = arith.divf %55, %56 : vector<128x1xf32>
    %58 = vector.broadcast %57 : vector<128x1xf32> to vector<128x32xf32>
    %59 = arith.subf %53, %58 : vector<128x32xf32>
    %60 = vector.broadcast %57 : vector<128x1xf32> to vector<128x32xf32>
    %61 = arith.subf %53, %60 : vector<128x32xf32>
    %62 = arith.mulf %59, %61 : vector<128x32xf32>
    %cst_32 = arith.constant dense<0.000000e+00> : vector<128xf32>
    %63 = vector.multi_reduction <add>, %62, %cst_32 [1] : vector<128x32xf32> to vector<128xf32>
    %64 = vector.shape_cast %63 : vector<128xf32> to vector<128x1xf32>
    %cst_33 = arith.constant 3.200000e+01 : f32
    %65 = vector.broadcast %cst_33 : f32 to vector<128x1xf32>
    %66 = arith.divf %64, %65 : vector<128x1xf32>
    %cst_34 = arith.constant 9.99999974E-6 : f32
    %67 = vector.broadcast %cst_34 : f32 to vector<128x1xf32>
    %68 = arith.addf %66, %67 : vector<128x1xf32>
    %69 = math.rsqrt %68 : vector<128x1xf32>
    %70 = vector.broadcast %57 : vector<128x1xf32> to vector<128x32xf32>
    %71 = arith.subf %53, %70 : vector<128x32xf32>
    %72 = vector.broadcast %69 : vector<128x1xf32> to vector<128x32xf32>
    %73 = arith.mulf %71, %72 : vector<128x32xf32>
    %74 = vector.broadcast %17 : vector<1x32xf32> to vector<128x32xf32>
    %75 = arith.mulf %73, %74 : vector<128x32xf32>
    %76 = vector.broadcast %18 : vector<1x32xf32> to vector<128x32xf32>
    %77 = arith.addf %75, %76 : vector<128x32xf32>
    %cst_35 = arith.constant dense<0.000000e+00> : vector<128x64xf32>
    %78 = tpu.matmul %77, %6, %cst_35 {dimension_numbers = #tpu.dot_dimension_numbers<[1], [0], [0], [1], [0, 0, 1, 1], [], []>} : vector<128x32xf32>, vector<32x64xf32>, vector<128x64xf32> -> vector<128x64xf32>
    %79 = vector.broadcast %19 : vector<1x64xf32> to vector<128x64xf32>
    %80 = arith.addf %78, %79 : vector<128x64xf32>
    %cst_36 = arith.constant 0.000000e+00 : f32
    %81 = vector.broadcast %cst_36 : f32 to vector<128x64xf32>
    %82 = arith.maximumf %80, %81 : vector<128x64xf32>
    %cst_37 = arith.constant dense<0.000000e+00> : vector<128x32xf32>
    %83 = tpu.matmul %82, %8, %cst_37 {dimension_numbers = #tpu.dot_dimension_numbers<[1], [0], [0], [1], [0, 0, 1, 1], [], []>} : vector<128x64xf32>, vector<64x32xf32>, vector<128x32xf32> -> vector<128x32xf32>
    %84 = vector.broadcast %20 : vector<1x32xf32> to vector<128x32xf32>
    %85 = arith.addf %83, %84 : vector<128x32xf32>
    %86 = arith.addf %77, %85 : vector<128x32xf32>
    %cst_38 = arith.constant dense<0.000000e+00> : vector<128xf32>
    %87 = vector.multi_reduction <add>, %86, %cst_38 [1] : vector<128x32xf32> to vector<128xf32>
    %88 = vector.shape_cast %87 : vector<128xf32> to vector<128x1xf32>
    %cst_39 = arith.constant 3.200000e+01 : f32
    %89 = vector.broadcast %cst_39 : f32 to vector<128x1xf32>
    %90 = arith.divf %88, %89 : vector<128x1xf32>
    %91 = vector.broadcast %90 : vector<128x1xf32> to vector<128x32xf32>
    %92 = arith.subf %86, %91 : vector<128x32xf32>
    %93 = vector.broadcast %90 : vector<128x1xf32> to vector<128x32xf32>
    %94 = arith.subf %86, %93 : vector<128x32xf32>
    %95 = arith.mulf %92, %94 : vector<128x32xf32>
    %cst_40 = arith.constant dense<0.000000e+00> : vector<128xf32>
    %96 = vector.multi_reduction <add>, %95, %cst_40 [1] : vector<128x32xf32> to vector<128xf32>
    %97 = vector.shape_cast %96 : vector<128xf32> to vector<128x1xf32>
    %cst_41 = arith.constant 3.200000e+01 : f32
    %98 = vector.broadcast %cst_41 : f32 to vector<128x1xf32>
    %99 = arith.divf %97, %98 : vector<128x1xf32>
    %cst_42 = arith.constant 9.99999974E-6 : f32
    %100 = vector.broadcast %cst_42 : f32 to vector<128x1xf32>
    %101 = arith.addf %99, %100 : vector<128x1xf32>
    %102 = math.rsqrt %101 : vector<128x1xf32>
    %103 = vector.broadcast %90 : vector<128x1xf32> to vector<128x32xf32>
    %104 = arith.subf %86, %103 : vector<128x32xf32>
    %105 = vector.broadcast %102 : vector<128x1xf32> to vector<128x32xf32>
    %106 = arith.mulf %104, %105 : vector<128x32xf32>
    %107 = vector.broadcast %21 : vector<1x32xf32> to vector<128x32xf32>
    %108 = arith.mulf %106, %107 : vector<128x32xf32>
    %109 = vector.broadcast %22 : vector<1x32xf32> to vector<128x32xf32>
    %110 = arith.addf %108, %109 : vector<128x32xf32>
    %c0_43 = arith.constant 0 : index
    %c0_44 = arith.constant 0 : index
    %111 = vector.load %arg6[%c0_43, %c0_44] : memref<16x128xf32, #tpu.memory_space<vmem>>, vector<16x128xf32>
    %cst_45 = arith.constant dense<0.000000e+00> : vector<16x32xf32>
    %112 = tpu.matmul %111, %110, %cst_45 {dimension_numbers = #tpu.dot_dimension_numbers<[1], [0], [0], [1], [0, 0, 1, 1], [], []>} : vector<16x128xf32>, vector<128x32xf32>, vector<16x32xf32> -> vector<16x32xf32>
    %cst_46 = arith.constant dense<0.000000e+00> : vector<16x128xf32>
    %113 = tpu.matmul %112, %10, %cst_46 {dimension_numbers = #tpu.dot_dimension_numbers<[1], [0], [0], [1], [0, 0, 1, 1], [], []>} : vector<16x32xf32>, vector<32x128xf32>, vector<16x128xf32> -> vector<16x128xf32>
    %114 = vector.broadcast %23 : vector<1x128xf32> to vector<16x128xf32>
    %115 = arith.addf %113, %114 : vector<16x128xf32>
    %c0_47 = arith.constant 0 : index
    %c0_48 = arith.constant 0 : index
    %116 = vector.load %arg7[%c0_47, %c0_48] : memref<16x128xf32, #tpu.memory_space<vmem>>, vector<16x128xf32>
    tpu.vector_store %arg7[%c0_47, %c0_48], %115 {strides = array<i32>} : memref<16x128xf32, #tpu.memory_space<vmem>>, vector<16x128xf32>,
    return
  }
  func.func @transform_0(%arg0: i32) -> (i32, i32) {
    %c0_i32 = arith.constant 0 : i32
    %c0_i32_0 = arith.constant 0 : i32
    return %arg0, %c0_i32 : i32, i32
  }
  func.func @transform_1(%arg0: i32) -> (i32, i32) {
    %c0_i32 = arith.constant 0 : i32
    %c0_i32_0 = arith.constant 0 : i32
    %c0_i32_1 = arith.constant 0 : i32
    return %c0_i32, %c0_i32_0 : i32, i32
  }
  func.func @transform_2(%arg0: i32) -> (i32, i32) {
    %c0_i32 = arith.constant 0 : i32
    %c0_i32_0 = arith.constant 0 : i32
    %c0_i32_1 = arith.constant 0 : i32
    return %c0_i32, %c0_i32_0 : i32, i32
  }
  func.func @transform_3(%arg0: i32) -> (i32, i32) {
    %c0_i32 = arith.constant 0 : i32
    %c0_i32_0 = arith.constant 0 : i32
    %c0_i32_1 = arith.constant 0 : i32
    return %c0_i32, %c0_i32_0 : i32, i32
  }
  func.func @transform_4(%arg0: i32) -> (i32, i32) {
    %c0_i32 = arith.constant 0 : i32
    %c0_i32_0 = arith.constant 0 : i32
    %c0_i32_1 = arith.constant 0 : i32
    return %c0_i32, %c0_i32_0 : i32, i32
  }
  func.func @transform_5(%arg0: i32) -> (i32, i32) {
    %c0_i32 = arith.constant 0 : i32
    %c0_i32_0 = arith.constant 0 : i32
    %c0_i32_1 = arith.constant 0 : i32
    return %c0_i32, %c0_i32_0 : i32, i32
  }
  func.func @transform_6(%arg0: i32) -> (i32, i32) {
    %c0_i32 = arith.constant 0 : i32
    %c0_i32_0 = arith.constant 0 : i32
    return %arg0, %c0_i32 : i32, i32
  }
}

</mosaic_0001>

<llo_original>
// kernel: _forward_impl.1
$region0: #{_forward_impl.1}
  #allocation0 [shape = 'u32[]', space=smem, size = 0x4, offset = 0x4, fixed_abs, tag = 'smem constant byte address 0x4 - core index']
  #allocation1 [shape = 'u32[144,128]{1,0:T(1,128)}', space=vmem, size = 0x12000, scoped, tag = 'internal scratch']
  %s0 = inlined_call_operand.vmem [shape: f32[128,16], index: 0, kind: input, shape index: {}]
  %s1 = inlined_call_operand.vmem [shape: bf16[272,128], index: 1, kind: input, shape index: {}]
  %s2 = inlined_call_operand.hbm [shape: bf16[48,384], index: 2, kind: input, shape index: {}]
  %s3 = inlined_call_operand.hbm [shape: f32[16,128], index: 3, kind: input, shape index: {}]
  %s4 = inlined_call_operand.hbm [shape: f32[128,128], index: 4, kind: input, shape index: {}]
  %s5 = inlined_call_operand.vmem [shape: f32[16,128], index: 5, kind: input, shape index: {}]
  %s6 = inlined_call_operand.vmem [shape: f32[16,128], index: 6, kind: output, shape index: {}]
  %s7 = sld [smem:[#allocation0]]
  $region46: #{_forward_impl.1} parent=0
    _
  %s9 = ssub.s32 1, %s7
  %s10 = scalar_select 0, %s9, %s7
  $region1: #{_forward_impl.1} parent=0
    #allocation2 [shape = 'u8[36864]{0}', space=vmem, size = 0x9000, scoped, tag = 'input window, operand 2, single buffered']
    #allocation3 [shape = 's32[1]{0}', space=sflag, size = 0x4, scoped, tag = 'scoped memory for _forward_impl.1']
    #allocation4 [shape = 'u8[8192]{0}', space=vmem, size = 0x2000, scoped, tag = 'input window, operand 3, single buffered']
    #allocation5 [shape = 's32[1]{0}', space=sflag, size = 0x4, scoped, tag = 'scoped memory for _forward_impl.1']
    #allocation6 [shape = 'u8[65536]{0}', space=vmem, size = 0x10000, scoped, tag = 'input window, operand 4, single buffered']
    %11 = vsyncpa [#allocation3], 0
    %12 = vsyncpa [#allocation5], 0
    // Predicated region
    $region2: #{_forward_impl.1} parent=1 // pred_check
      _
    $region3: #{_forward_impl.1} parent=1 // pred_check_branch
      %14 = sbr.rel (0) target = $region5
    $region4: #{_forward_impl.1} parent=1 // pred_region
      _
    $region5: #{_forward_impl.1} parent=1 // pred_fallthru
      _
    // Predicated region
    $region6: #{_forward_impl.1} parent=1 // pred_check
      _
    $region7: #{_forward_impl.1} parent=1 // pred_check_branch
      %16 = sbr.rel (0) target = $region9
    $region8: #{_forward_impl.1} parent=1 // pred_region
      _
    $region9: #{_forward_impl.1} parent=1 // pred_fallthru
      _
    // Predicated region
    $region10: #{_forward_impl.1} parent=1 // pred_check
      _
    $region11: #{_forward_impl.1} parent=1 // pred_check_branch
      %18 = sbr.rel (0) target = $region13
    $region12: #{_forward_impl.1} parent=1 // pred_region
      %s20 = ssub.s32 1152, 1152
      %21 = vsyncadd [#allocation3], %s20
      %s22 = sshll.u32 [#allocation2], 4
      %s23 = int_to_ptr.vmem [resolvable:$true] %s22
      %28 = dma.hbm_to_vmem [thread:$0]  %s2, 1152, %s23, [#allocation3], 192, 192, 12
    $region13: #{_forward_impl.1} parent=1 // pred_fallthru
      _
    // Predicated region
    $region14: #{_forward_impl.1} parent=1 // pred_check
      _
    $region15: #{_forward_impl.1} parent=1 // pred_check_branch
      %30 = sbr.rel (0) target = $region17
    $region16: #{_forward_impl.1} parent=1 // pred_region
      %s32 = ssub.s32 256, 256
      %33 = vsyncadd [#allocation5], %s32
      %s34 = sshll.u32 [#allocation4], 4
      %s35 = int_to_ptr.vmem [resolvable:$true] %s34
      %40 = dma.hbm_to_vmem [thread:$0]  %s3, 256, %s35, [#allocation5], 128, 128, 8
    $region17: #{_forward_impl.1} parent=1 // pred_fallthru
      _
    // Predicated region
    $region18: #{_forward_impl.1} parent=1 // pred_check
      _
    $region19: #{_forward_impl.1} parent=1 // pred_check_branch
      %42 = sbr.rel (0) target = $region21
    $region20: #{_forward_impl.1} parent=1 // pred_region
      %s44 = ssub.s32 2048, 2048
      %45 = vsyncadd [#allocation5], %s44
      %s46 = sshll.u32 [#allocation6], 4
      %s47 = int_to_ptr.vmem [resolvable:$true] %s46
      %52 = dma.hbm_to_vmem [thread:$0]  %s4, 2048, %s47, [#allocation5], 128, 128, 8
    $region21: #{_forward_impl.1} parent=1 // pred_fallthru
      _
    // Predicated region
    $region22: #{_forward_impl.1} parent=1 // pred_check
      _
    $region23: #{_forward_impl.1} parent=1 // pred_check_branch
      %54 = sbr.rel (0) target = $region25
    $region24: #{_forward_impl.1} parent=1 // pred_region
      _
    $region25: #{_forward_impl.1} parent=1 // pred_fallthru
      _
    // Predicated region
    $region26: #{_forward_impl.1} parent=1 // pred_check
      _
    $region27: #{_forward_impl.1} parent=1 // pred_check_branch
      %56 = sbr.rel (0) target = $region29
    $region28: #{_forward_impl.1} parent=1 // pred_region
      %57 = dma.done [#allocation3], 1152
    $region29: #{_forward_impl.1} parent=1 // pred_fallthru
      _
    // Predicated region
    $region30: #{_forward_impl.1} parent=1 // pred_check
      _
    $region31: #{_forward_impl.1} parent=1 // pred_check_branch
      %59 = sbr.rel (0) target = $region33
    $region32: #{_forward_impl.1} parent=1 // pred_region
      %60 = dma.done [#allocation5], 256
    $region33: #{_forward_impl.1} parent=1 // pred_fallthru
      _
    // Predicated region
    $region34: #{_forward_impl.1} parent=1 // pred_check
      _
    $region35: #{_forward_impl.1} parent=1 // pred_check_branch
      %62 = sbr.rel (0) target = $region37
    $region36: #{_forward_impl.1} parent=1 // pred_region
      %63 = dma.done [#allocation5], 2048
    $region37: #{_forward_impl.1} parent=1 // pred_fallthru
      _
    %v64 = vld [vmem:[%s0] sm:$0xff]
    %v65 = vld [vmem:[%s0 + $0x8] sm:$0xff]
    %v66 = vld [vmem:[%s0 + $0x10] sm:$0xff]
    %v67 = vld [vmem:[%s0 + $0x18] sm:$0xff]
    %v68 = vld [vmem:[%s0 + $0x20] sm:$0xff]
    %v69 = vld [vmem:[%s0 + $0x28] sm:$0xff]
    %v70 = vld [vmem:[%s0 + $0x30] sm:$0xff]
    %v71 = vld [vmem:[%s0 + $0x38] sm:$0xff]
    %v72 = vld [vmem:[%s0 + $0x40] sm:$0xff]
    %v73 = vld [vmem:[%s0 + $0x48] sm:$0xff]
    %v74 = vld [vmem:[%s0 + $0x50] sm:$0xff]
    %v75 = vld [vmem:[%s0 + $0x58] sm:$0xff]
    %v76 = vld [vmem:[%s0 + $0x60] sm:$0xff]
    %v77 = vld [vmem:[%s0 + $0x68] sm:$0xff]
    %v78 = vld [vmem:[%s0 + $0x70] sm:$0xff]
    %v79 = vld [vmem:[%s0 + $0x78] sm:$0xff]
    %v80 = vld [vmem:[%s1] sm:$0xf]
    %v81 = vld [vmem:[%s1 + $0x4] sm:$0xf]
    %v82 = vunpack.c.l.bf16 %v80
    %v83 = vunpack.c.l.bf16 %v81
    %v84 = vld [vmem:[%s1 + $0x8] sm:$0xf]
    %v85 = vld [vmem:[%s1 + $0xc] sm:$0xf]
    %v86 = vld [vmem:[%s1 + $0x10] sm:$0xf]
    %v87 = vld [vmem:[%s1 + $0x14] sm:$0xf]
    %v88 = vld [vmem:[%s1 + $0x18] sm:$0xf]
    %v89 = vld [vmem:[%s1 + $0x1c] sm:$0xf]
    %v90 = vld [vmem:[%s1 + $0x20] sm:$0xf]
    %v91 = vld [vmem:[%s1 + $0x24] sm:$0xf]
    %v92 = vld [vmem:[%s1 + $0x28] sm:$0xf]
    %v93 = vld [vmem:[%s1 + $0x2c] sm:$0xf]
    %v94 = vld [vmem:[%s1 + $0x30] sm:$0xf]
    %v95 = vld [vmem:[%s1 + $0x34] sm:$0xf]
    %v96 = vld [vmem:[%s1 + $0x38] sm:$0xf]
    %v97 = vld [vmem:[%s1 + $0x3c] sm:$0xf]
    %v98 = vld [vmem:[%s1 + $0x40] sm:$0xf]
    %v99 = vld [vmem:[%s1 + $0x44] sm:$0xf]
    %v100 = vunpack.c.l.bf16 %v84
    %v101 = vunpack.c.l.bf16 %v85
    %v102 = vunpack.c.l.bf16 %v86
    %v103 = vunpack.c.l.bf16 %v87
    %v104 = vunpack.c.l.bf16 %v88
    %v105 = vunpack.c.l.bf16 %v89
    %v106 = vunpack.c.l.bf16 %v90
    %v107 = vunpack.c.l.bf16 %v91
    %v108 = vunpack.c.l.bf16 %v92
    %v109 = vunpack.c.l.bf16 %v93
    %v110 = vunpack.c.l.bf16 %v94
    %v111 = vunpack.c.l.bf16 %v95
    %v112 = vunpack.c.l.bf16 %v96
    %v113 = vunpack.c.l.bf16 %v97
    %v114 = vunpack.c.l.bf16 %v98
    %v115 = vunpack.c.l.bf16 %v99
    %v116 = vld [vmem:[%s1 + $0x48] sm:$0xf]
    %v117 = vld [vmem:[%s1 + $0x4c] sm:$0xf]
    %v118 = vld [vmem:[%s1 + $0x50] sm:$0xf]
    %v119 = vld [vmem:[%s1 + $0x54] sm:$0xf]
    %v120 = vunpack.c.l.bf16 %v116
    %v121 = vunpack.c.l.bf16 %v117
    %v122 = vunpack.c.l.bf16 %v118
    %v123 = vunpack.c.l.bf16 %v119
    %v124 = vld [vmem:[%s1 + $0x58] sm:$0xf]
    %v125 = vld [vmem:[%s1 + $0x5c] sm:$0xf]
    %v126 = vld [vmem:[%s1 + $0x60] sm:$0xf]
    %v127 = vld [vmem:[%s1 + $0x64] sm:$0xf]
    %v128 = vld [vmem:[%s1 + $0x68] sm:$0xf]
    %v129 = vld [vmem:[%s1 + $0x6c] sm:$0xf]
    %v130 = vld [vmem:[%s1 + $0x70] sm:$0xf]
    %v131 = vld [vmem:[%s1 + $0x74] sm:$0xf]
    %v132 = vunpack.c.l.bf16 %v124
    %v133 = vunpack.c.l.bf16 %v125
    %v134 = vunpack.c.l.bf16 %v126
    %v135 = vunpack.c.l.bf16 %v127
    %v136 = vunpack.c.l.bf16 %v128
    %v137 = vunpack.c.l.bf16 %v129
    %v138 = vunpack.c.l.bf16 %v130
    %v139 = vunpack.c.l.bf16 %v131
    %v140 = vld [vmem:[%s1 + $0x78] sm:$0xf]
    %v141 = vld [vmem:[%s1 + $0x7c] sm:$0xf]
    %v142 = vld [vmem:[%s1 + $0x80] sm:$0xf]
    %v143 = vld [vmem:[%s1 + $0x84] sm:$0xf]
    %v144 = vunpack.c.l.bf16 %v140
    %v145 = vunpack.c.l.bf16 %v141
    %v146 = vunpack.c.l.bf16 %v142
    %v147 = vunpack.c.l.bf16 %v143
    %v148 = vld [vmem:[#allocation2] sm:$0xff]
    %v149 = vld [vmem:[#allocation2 + $0x8] sm:$0xf]
    %v150 = vld [vmem:[#allocation2 + $0xc] sm:$0xff]
    %v151 = vld [vmem:[#allocation2 + $0x14] sm:$0xf]
    %v152 = vld [vmem:[#allocation2 + $0x18] sm:$0xff]
    %v153 = vld [vmem:[#allocation2 + $0x20] sm:$0xf]
    %v154 = vld [vmem:[#allocation2 + $0x24] sm:$0xff]
    %v155 = vld [vmem:[#allocation2 + $0x2c] sm:$0xf]
    %v156 = vunpack.c.l.bf16 %v148
    %v157 = vunpack.c.h.bf16 %v148
    %v158 = vunpack.c.l.bf16 %v149
    %v159 = vunpack.c.l.bf16 %v150
    %v160 = vunpack.c.h.bf16 %v150
    %v161 = vunpack.c.l.bf16 %v151
    %v162 = vunpack.c.l.bf16 %v152
    %v163 = vunpack.c.h.bf16 %v152
    %v164 = vunpack.c.l.bf16 %v153
    %v165 = vunpack.c.l.bf16 %v154
    %v166 = vunpack.c.h.bf16 %v154
    %v167 = vunpack.c.l.bf16 %v155
    %v168 = vld [vmem:[#allocation2 + $0x30] sm:$0x11]
    %v169 = vld [vmem:[#allocation2 + $0x38] sm:$0x1]
    %v170 = vunpack.c.l.bf16 %v168
    %v171 = vunpack.c.h.bf16 %v168
    %v172 = vunpack.c.l.bf16 %v169
    %v173 = vld [vmem:[#allocation4] sm:$0x1]
    %v174 = vld [vmem:[#allocation4 + $0x1] sm:$0x1]
    %v175 = vld [vmem:[#allocation4 + $0x2] sm:$0x1]
    %v176 = vld [vmem:[#allocation4 + $0x3] sm:$0x1]
    %v177 = vld [vmem:[#allocation4 + $0x4] sm:$0x1]
    %v178 = vld [vmem:[#allocation4 + $0x5] sm:$0x1]
    %v179 = vld [vmem:[#allocation4 + $0x6] sm:$0x1]
    %v180 = vld [vmem:[#allocation4 + $0x7] sm:$0x1]
    %v181 = vld [vmem:[#allocation4 + $0x8] sm:$0x1]
    %v182 = vlaneseq
    %v183 = vshrl.u32 %v182, 7
    %v184 = vsub.s32 0, %v183
    %v185 = vrot.slane %v173, %v184
    %vm186 = vcmask 130048
    %v188 = vsel %vm186, %v64, 0
    %v191 = vsel %vm186, %v65, 0
    %v194 = vsel %vm186, %v66, 0
    %v197 = vsel %vm186, %v67, 0
    %v200 = vsel %vm186, %v68, 0
    %v203 = vsel %vm186, %v69, 0
    %v206 = vsel %vm186, %v70, 0
    %v209 = vsel %vm186, %v71, 0
    %v212 = vsel %vm186, %v72, 0
    %v215 = vsel %vm186, %v73, 0
    %v218 = vsel %vm186, %v74, 0
    %v221 = vsel %vm186, %v75, 0
    %v224 = vsel %vm186, %v76, 0
    %v227 = vsel %vm186, %v77, 0
    %v230 = vsel %vm186, %v78, 0
    %v233 = vsel %vm186, %v79, 0
    %235 = vmatprep.subr.mxu0 0.0
    %236 = vmatpush1.msra.mxu0 0.0
    %237 = vmatprep.subr.mxu0 0.0
    %238 = vmatpush1.msra.mxu0 0.0
    %239 = vmatprep.subr.mxu0 0.0
    %240 = vmatpush1.msra.mxu0 0.0
    %241 = vmatprep.subr.mxu0 0.0
    %242 = vmatpush1.msra.mxu0 0.0
    %243 = vmatprep.subr.mxu0 0.0
    %244 = vmatpush1.msra.mxu0 0.0
    %245 = vmatprep.subr.mxu0 0.0
    %246 = vmatpush1.msra.mxu0 0.0
    %247 = vmatprep.subr.mxu0 0.0
    %248 = vmatpush1.msra.mxu0 0.0
    %249 = vmatprep.subr.mxu0 0.0
    %250 = vmatpush1.msra.mxu0 0.0
    %251 = vmatprep.subr.mxu0 0.0
    %252 = vmatpush1.msra.mxu0 0.0
    %253 = vmatprep.subr.mxu0 0.0
    %254 = vmatpush1.msra.mxu0 0.0
    %255 = vmatprep.subr.mxu0 0.0
    %256 = vmatpush1.msra.mxu0 0.0
    %257 = vmatprep.subr.mxu0 0.0
    %258 = vmatpush1.msra.mxu0 0.0
    %259 = vmatprep.subr.mxu0 0.0
    %260 = vmatpush1.msra.mxu0 0.0
    %261 = vmatprep.subr.mxu0 0.0
    %262 = vmatpush1.msra.mxu0 0.0
    %263 = vmatprep.subr.mxu0 0.0
    %264 = vmatpush1.msra.mxu0 %v83
    %265 = vmatprep.subr.mxu0 0.0
    %266 = vmatpush1.msra.mxu0 %v82
    %267 = vmatprep.subr.mxu0 0.0
    %268 = vmatpush2.msra.mxu0 0.0
    %269 = vmatprep.subr.mxu0 0.0
    %270 = vmatpush2.msra.mxu0 0.0
    %271 = vmatprep.subr.mxu0 0.0
    %272 = vmatpush2.msra.mxu0 0.0
    %273 = vmatprep.subr.mxu0 0.0
    %274 = vmatpush2.msra.mxu0 0.0
    %275 = vmatprep.subr.mxu0 0.0
    %276 = vmatpush2.msra.mxu0 0.0
    %277 = vmatprep.subr.mxu0 0.0
    %278 = vmatpush2.msra.mxu0 0.0
    %279 = vmatprep.subr.mxu0 0.0
    %280 = vmatpush2.msra.mxu0 0.0
    %281 = vmatprep.subr.mxu0 0.0
    %282 = vmatpush2.msra.mxu0 0.0
    %283 = vmatprep.subr.mxu0 0.0
    %284 = vmatpush2.msra.mxu0 0.0
    %285 = vmatprep.subr.mxu0 0.0
    %286 = vmatpush2.msra.mxu0 0.0
    %287 = vmatprep.subr.mxu0 0.0
    %288 = vmatpush2.msra.mxu0 0.0
    %289 = vmatprep.subr.mxu0 0.0
    %290 = vmatpush2.msra.mxu0 0.0
    %291 = vmatprep.subr.mxu0 0.0
    %292 = vmatpush2.msra.mxu0 0.0
    %293 = vmatprep.subr.mxu0 0.0
    %294 = vmatpush2.msra.mxu0 0.0
    %295 = vmatprep.subr.mxu0 0.0
    %296 = vmatpush2.msra.mxu0 0.0
    %297 = vmatprep.subr.mxu0 0.0
    %298 = vmatpush2.msra.mxu0 0.0
    %299 = vmatprep.mubr.f32.mxu0 0.0
    %300 = vmatmul.mubr.f32.gmra.mxu0 %v188
    %v301 = vpop.f32.mrf.mxu0
    %v302 = vadd.f32 %v185, %v301
    %v303 = vpop.f32.mrf.mxu0
    %304 = vmatprep.mubr.f32.mxu0 0.0
    %305 = vmatmul.mubr.f32.gmra.mxu0 %v191
    %v306 = vpop.f32.mrf.mxu0
    %v307 = vadd.f32 %v185, %v306
    %v308 = vpop.f32.mrf.mxu0
    %309 = vmatprep.mubr.f32.mxu0 0.0
    %310 = vmatmul.mubr.f32.gmra.mxu0 %v194
    %v311 = vpop.f32.mrf.mxu0
    %v312 = vadd.f32 %v185, %v311
    %v313 = vpop.f32.mrf.mxu0
    %314 = vmatprep.mubr.f32.mxu0 0.0
    %315 = vmatmul.mubr.f32.gmra.mxu0 %v197
    %v316 = vpop.f32.mrf.mxu0
    %v317 = vadd.f32 %v185, %v316
    %v318 = vpop.f32.mrf.mxu0
    %319 = vmatprep.mubr.f32.mxu0 0.0
    %320 = vmatmul.mubr.f32.gmra.mxu0 %v200
    %v321 = vpop.f32.mrf.mxu0
    %v322 = vadd.f32 %v185, %v321
    %v323 = vpop.f32.mrf.mxu0
    %324 = vmatprep.mubr.f32.mxu0 0.0
    %325 = vmatmul.mubr.f32.gmra.mxu0 %v203
    %v326 = vpop.f32.mrf.mxu0
    %v327 = vadd.f32 %v185, %v326
    %v328 = vpop.f32.mrf.mxu0
    %329 = vmatprep.mubr.f32.mxu0 0.0
    %330 = vmatmul.mubr.f32.gmra.mxu0 %v206
    %v331 = vpop.f32.mrf.mxu0
    %v332 = vadd.f32 %v185, %v331
    %v333 = vpop.f32.mrf.mxu0
    %334 = vmatprep.mubr.f32.mxu0 0.0
    %335 = vmatmul.mubr.f32.gmra.mxu0 %v209
    %v336 = vpop.f32.mrf.mxu0
    %v337 = vadd.f32 %v185, %v336
    %v338 = vpop.f32.mrf.mxu0
    %339 = vmatprep.mubr.f32.mxu0 0.0
    %340 = vmatmul.mubr.f32.gmra.mxu0 %v212
    %v341 = vpop.f32.mrf.mxu0
    %v342 = vadd.f32 %v185, %v341
    %v343 = vpop.f32.mrf.mxu0
    %344 = vmatprep.mubr.f32.mxu0 0.0
    %345 = vmatmul.mubr.f32.gmra.mxu0 %v215
    %v346 = vpop.f32.mrf.mxu0
    %v347 = vadd.f32 %v185, %v346
    %v348 = vpop.f32.mrf.mxu0
    %349 = vmatprep.mubr.f32.mxu0 0.0
    %350 = vmatmul.mubr.f32.gmra.mxu0 %v218
    %v351 = vpop.f32.mrf.mxu0
    %v352 = vadd.f32 %v185, %v351
    %v353 = vpop.f32.mrf.mxu0
    %354 = vmatprep.mubr.f32.mxu0 0.0
    %355 = vmatmul.mubr.f32.gmra.mxu0 %v221
    %v356 = vpop.f32.mrf.mxu0
    %v357 = vadd.f32 %v185, %v356
    %v358 = vpop.f32.mrf.mxu0
    %359 = vmatprep.mubr.f32.mxu0 0.0
    %360 = vmatmul.mubr.f32.gmra.mxu0 %v224
    %v361 = vpop.f32.mrf.mxu0
    %v362 = vadd.f32 %v185, %v361
    %v363 = vpop.f32.mrf.mxu0
    %364 = vmatprep.mubr.f32.mxu0 0.0
    %365 = vmatmul.mubr.f32.gmra.mxu0 %v227
    %v366 = vpop.f32.mrf.mxu0
    %v367 = vadd.f32 %v185, %v366
    %v368 = vpop.f32.mrf.mxu0
    %369 = vmatprep.mubr.f32.mxu0 0.0
    %370 = vmatmul.mubr.f32.gmra.mxu0 %v230
    %v371 = vpop.f32.mrf.mxu0
    %v372 = vadd.f32 %v185, %v371
    %v373 = vpop.f32.mrf.mxu0
    %374 = vmatprep.mubr.f32.mxu0 0.0
    %375 = vmatmul.mubr.f32.gmra.mxu0 %v233
    %v376 = vpop.f32.mrf.mxu0
    %v377 = vadd.f32 %v185, %v376
    %v378 = vpop.f32.mrf.mxu0
    %379 = vdwg.mxu0
    %v380 = vlaneseq
    %v381 = vshrl.u32 %v380, 7
    %v382 = vsub.s32 0, %v381
    %v383 = vrot.slane %v170, %v382
    %v384 = vlaneseq
    %v385 = vshrl.u32 %v384, 7
    %v386 = vsub.s32 0, %v385
    %v387 = vrot.slane %v171, %v386
    %v388 = vlaneseq
    %v389 = vshrl.u32 %v388, 7
    %v390 = vsub.s32 0, %v389
    %v391 = vrot.slane %v172, %v390
    %vm392 = vcmask 261120
    %v394 = vsel %vm392, %v302, 0
    %v397 = vsel %vm392, %v307, 0
    %v400 = vsel %vm392, %v312, 0
    %v403 = vsel %vm392, %v317, 0
    %v406 = vsel %vm392, %v322, 0
    %v409 = vsel %vm392, %v327, 0
    %v412 = vsel %vm392, %v332, 0
    %v415 = vsel %vm392, %v337, 0
    %v418 = vsel %vm392, %v342, 0
    %v421 = vsel %vm392, %v347, 0
    %v424 = vsel %vm392, %v352, 0
    %v427 = vsel %vm392, %v357, 0
    %v430 = vsel %vm392, %v362, 0
    %v433 = vsel %vm392, %v367, 0
    %v436 = vsel %vm392, %v372, 0
    %v439 = vsel %vm392, %v377, 0
    %441 = vmatprep.subr.mxu0 0.0
    %442 = vmatpush1.msra.mxu0 0.0
    %443 = vmatprep.subr.mxu0 0.0
    %444 = vmatpush1.msra.mxu0 0.0
    %445 = vmatprep.subr.mxu0 0.0
    %446 = vmatpush1.msra.mxu0 0.0
    %447 = vmatprep.subr.mxu0 0.0
    %448 = vmatpush1.msra.mxu0 0.0
    %449 = vmatprep.subr.mxu0 0.0
    %450 = vmatpush1.msra.mxu0 0.0
    %451 = vmatprep.subr.mxu0 0.0
    %452 = vmatpush1.msra.mxu0 0.0
    %453 = vmatprep.subr.mxu0 0.0
    %454 = vmatpush1.msra.mxu0 0.0
    %455 = vmatprep.subr.mxu0 0.0
    %456 = vmatpush1.msra.mxu0 0.0
    %457 = vmatprep.subr.mxu0 0.0
    %458 = vmatpush1.msra.mxu0 0.0
    %459 = vmatprep.subr.mxu0 0.0
    %460 = vmatpush1.msra.mxu0 0.0
    %461 = vmatprep.subr.mxu0 0.0
    %462 = vmatpush1.msra.mxu0 0.0
    %463 = vmatprep.subr.mxu0 0.0
    %464 = vmatpush1.msra.mxu0 0.0
    %465 = vmatprep.subr.mxu0 %v166
    %466 = vmatpush1.msra.mxu0 %v165
    %467 = vmatprep.subr.mxu0 %v163
    %468 = vmatpush1.msra.mxu0 %v162
    %469 = vmatprep.subr.mxu0 %v160
    %470 = vmatpush1.msra.mxu0 %v159
    %471 = vmatprep.subr.mxu0 %v157
    %472 = vmatpush1.msra.mxu0 %v156
    %473 = vmatprep.subr.mxu0 0.0
    %474 = vmatpush2.msra.mxu0 0.0
    %475 = vmatprep.subr.mxu0 0.0
    %476 = vmatpush2.msra.mxu0 0.0
    %477 = vmatprep.subr.mxu0 0.0
    %478 = vmatpush2.msra.mxu0 0.0
    %479 = vmatprep.subr.mxu0 0.0
    %480 = vmatpush2.msra.mxu0 0.0
    %481 = vmatprep.subr.mxu0 0.0
    %482 = vmatpush2.msra.mxu0 0.0
    %483 = vmatprep.subr.mxu0 0.0
    %484 = vmatpush2.msra.mxu0 0.0
    %485 = vmatprep.subr.mxu0 0.0
    %486 = vmatpush2.msra.mxu0 0.0
    %487 = vmatprep.subr.mxu0 0.0
    %488 = vmatpush2.msra.mxu0 0.0
    %489 = vmatprep.subr.mxu0 0.0
    %490 = vmatpush2.msra.mxu0 0.0
    %491 = vmatprep.subr.mxu0 0.0
    %492 = vmatpush2.msra.mxu0 0.0
    %493 = vmatprep.subr.mxu0 0.0
    %494 = vmatpush2.msra.mxu0 0.0
    %495 = vmatprep.subr.mxu0 0.0
    %496 = vmatpush2.msra.mxu0 0.0
    %497 = vmatprep.subr.mxu0 0.0
    %498 = vmatpush2.msra.mxu0 0.0
    %499 = vmatprep.subr.mxu0 0.0
    %500 = vmatpush2.msra.mxu0 0.0
    %501 = vmatprep.subr.mxu0 0.0
    %502 = vmatpush2.msra.mxu0 0.0
    %503 = vmatprep.subr.mxu0 0.0
    %504 = vmatpush2.msra.mxu0 0.0
    %505 = vmatprep.mubr.f32.mxu0 0.0
    %506 = vmatmul.mubr.f32.gmra.mxu0 %v394
    %v507 = vpop.f32.mrf.mxu0
    %v508 = vadd.f32 %v383, %v507
    %v509 = vpop.f32.mrf.mxu0
    %v510 = vadd.f32 %v387, %v509
    %511 = vmatprep.mubr.f32.mxu0 0.0
    %512 = vmatmul.mubr.f32.gmra.mxu0 %v397
    %v513 = vpop.f32.mrf.mxu0
    %v514 = vadd.f32 %v383, %v513
    %v515 = vpop.f32.mrf.mxu0
    %v516 = vadd.f32 %v387, %v515
    %517 = vmatprep.mubr.f32.mxu0 0.0
    %518 = vmatmul.mubr.f32.gmra.mxu0 %v400
    %v519 = vpop.f32.mrf.mxu0
    %v520 = vadd.f32 %v383, %v519
    %v521 = vpop.f32.mrf.mxu0
    %v522 = vadd.f32 %v387, %v521
    %523 = vmatprep.mubr.f32.mxu0 0.0
    %524 = vmatmul.mubr.f32.gmra.mxu0 %v403
    %v525 = vpop.f32.mrf.mxu0
    %v526 = vadd.f32 %v383, %v525
    %v527 = vpop.f32.mrf.mxu0
    %v528 = vadd.f32 %v387, %v527
    %529 = vmatprep.mubr.f32.mxu0 0.0
    %530 = vmatmul.mubr.f32.gmra.mxu0 %v406
    %v531 = vpop.f32.mrf.mxu0
    %v532 = vadd.f32 %v383, %v531
    %v533 = vpop.f32.mrf.mxu0
    %v534 = vadd.f32 %v387, %v533
    %535 = vmatprep.mubr.f32.mxu0 0.0
    %536 = vmatmul.mubr.f32.gmra.mxu0 %v409
    %v537 = vpop.f32.mrf.mxu0
    %v538 = vadd.f32 %v383, %v537
    %v539 = vpop.f32.mrf.mxu0
    %v540 = vadd.f32 %v387, %v539
    %541 = vmatprep.mubr.f32.mxu0 0.0
    %542 = vmatmul.mubr.f32.gmra.mxu0 %v412
    %v543 = vpop.f32.mrf.mxu0
    %v544 = vadd.f32 %v383, %v543
    %v545 = vpop.f32.mrf.mxu0
    %v546 = vadd.f32 %v387, %v545
    %547 = vmatprep.mubr.f32.mxu0 0.0
    %548 = vmatmul.mubr.f32.gmra.mxu0 %v415
    %v549 = vpop.f32.mrf.mxu0
    %v550 = vadd.f32 %v383, %v549
    %v551 = vpop.f32.mrf.mxu0
    %v552 = vadd.f32 %v387, %v551
    %553 = vmatprep.mubr.f32.mxu0 0.0
    %554 = vmatmul.mubr.f32.gmra.mxu0 %v418
    %v555 = vpop.f32.mrf.mxu0
    %v556 = vadd.f32 %v383, %v555
    %v557 = vpop.f32.mrf.mxu0
    %v558 = vadd.f32 %v387, %v557
    %559 = vmatprep.mubr.f32.mxu0 0.0
    %560 = vmatmul.mubr.f32.gmra.mxu0 %v421
    %v561 = vpop.f32.mrf.mxu0
    %v562 = vadd.f32 %v383, %v561
    %v563 = vpop.f32.mrf.mxu0
    %v564 = vadd.f32 %v387, %v563
    %565 = vmatprep.mubr.f32.mxu0 0.0
    %566 = vmatmul.mubr.f32.gmra.mxu0 %v424
    %v567 = vpop.f32.mrf.mxu0
    %v568 = vadd.f32 %v383, %v567
    %v569 = vpop.f32.mrf.mxu0
    %v570 = vadd.f32 %v387, %v569
    %571 = vmatprep.mubr.f32.mxu0 0.0
    %572 = vmatmul.mubr.f32.gmra.mxu0 %v427
    %v573 = vpop.f32.mrf.mxu0
    %v574 = vadd.f32 %v383, %v573
    %v575 = vpop.f32.mrf.mxu0
    %v576 = vadd.f32 %v387, %v575
    %577 = vmatprep.mubr.f32.mxu0 0.0
    %578 = vmatmul.mubr.f32.gmra.mxu0 %v430
    %v579 = vpop.f32.mrf.mxu0
    %v580 = vadd.f32 %v383, %v579
    %v581 = vpop.f32.mrf.mxu0
    %v582 = vadd.f32 %v387, %v581
    %583 = vmatprep.mubr.f32.mxu0 0.0
    %584 = vmatmul.mubr.f32.gmra.mxu0 %v433
    %v585 = vpop.f32.mrf.mxu0
    %v586 = vadd.f32 %v383, %v585
    %v587 = vpop.f32.mrf.mxu0
    %v588 = vadd.f32 %v387, %v587
    %589 = vmatprep.mubr.f32.mxu0 0.0
    %590 = vmatmul.mubr.f32.gmra.mxu0 %v436
    %v591 = vpop.f32.mrf.mxu0
    %v592 = vadd.f32 %v383, %v591
    %v593 = vpop.f32.mrf.mxu0
    %v594 = vadd.f32 %v387, %v593
    %595 = vmatprep.mubr.f32.mxu0 0.0
    %596 = vmatmul.mubr.f32.gmra.mxu0 %v439
    %v597 = vpop.f32.mrf.mxu0
    %v598 = vadd.f32 %v383, %v597
    %v599 = vpop.f32.mrf.mxu0
    %v600 = vadd.f32 %v387, %v599
    %601 = vdwg.mxu0
    %602 = vmatprep.subr.mxu0 0.0
    %603 = vmatpush1.msra.mxu0 0.0
    %604 = vmatprep.subr.mxu0 0.0
    %605 = vmatpush1.msra.mxu0 0.0
    %606 = vmatprep.subr.mxu0 0.0
    %607 = vmatpush1.msra.mxu0 0.0
    %608 = vmatprep.subr.mxu0 0.0
    %609 = vmatpush1.msra.mxu0 0.0
    %610 = vmatprep.subr.mxu0 0.0
    %611 = vmatpush1.msra.mxu0 0.0
    %612 = vmatprep.subr.mxu0 0.0
    %613 = vmatpush1.msra.mxu0 0.0
    %614 = vmatprep.subr.mxu0 0.0
    %615 = vmatpush1.msra.mxu0 0.0
    %616 = vmatprep.subr.mxu0 0.0
    %617 = vmatpush1.msra.mxu0 0.0
    %618 = vmatprep.subr.mxu0 0.0
    %619 = vmatpush1.msra.mxu0 0.0
    %620 = vmatprep.subr.mxu0 0.0
    %621 = vmatpush1.msra.mxu0 0.0
    %622 = vmatprep.subr.mxu0 0.0
    %623 = vmatpush1.msra.mxu0 0.0
    %624 = vmatprep.subr.mxu0 0.0
    %625 = vmatpush1.msra.mxu0 0.0
    %626 = vmatprep.subr.mxu0 0.0
    %627 = vmatpush1.msra.mxu0 %v167
    %628 = vmatprep.subr.mxu0 0.0
    %629 = vmatpush1.msra.mxu0 %v164
    %630 = vmatprep.subr.mxu0 0.0
    %631 = vmatpush1.msra.mxu0 %v161
    %632 = vmatprep.subr.mxu0 0.0
    %633 = vmatpush1.msra.mxu0 %v158
    %634 = vmatprep.subr.mxu0 0.0
    %635 = vmatpush2.msra.mxu0 0.0
    %636 = vmatprep.subr.mxu0 0.0
    %637 = vmatpush2.msra.mxu0 0.0
    %638 = vmatprep.subr.mxu0 0.0
    %639 = vmatpush2.msra.mxu0 0.0
    %640 = vmatprep.subr.mxu0 0.0
    %641 = vmatpush2.msra.mxu0 0.0
    %642 = vmatprep.subr.mxu0 0.0
    %643 = vmatpush2.msra.mxu0 0.0
    %644 = vmatprep.subr.mxu0 0.0
    %645 = vmatpush2.msra.mxu0 0.0
    %646 = vmatprep.subr.mxu0 0.0
    %647 = vmatpush2.msra.mxu0 0.0
    %648 = vmatprep.subr.mxu0 0.0
    %649 = vmatpush2.msra.mxu0 0.0
    %650 = vmatprep.subr.mxu0 0.0
    %651 = vmatpush2.msra.mxu0 0.0
    %652 = vmatprep.subr.mxu0 0.0
    %653 = vmatpush2.msra.mxu0 0.0
    %654 = vmatprep.subr.mxu0 0.0
    %655 = vmatpush2.msra.mxu0 0.0
    %656 = vmatprep.subr.mxu0 0.0
    %657 = vmatpush2.msra.mxu0 0.0
    %658 = vmatprep.subr.mxu0 0.0
    %659 = vmatpush2.msra.mxu0 0.0
    %660 = vmatprep.subr.mxu0 0.0
    %661 = vmatpush2.msra.mxu0 0.0
    %662 = vmatprep.subr.mxu0 0.0
    %663 = vmatpush2.msra.mxu0 0.0
    %664 = vmatprep.subr.mxu0 0.0
    %665 = vmatpush2.msra.mxu0 0.0
    %666 = vmatprep.mubr.f32.mxu0 0.0
    %667 = vmatmul.mubr.f32.gmra.mxu0 %v394
    %v668 = vpop.f32.mrf.mxu0
    %v669 = vadd.f32 %v391, %v668
    %v670 = vpop.f32.mrf.mxu0
    %671 = vmatprep.mubr.f32.mxu0 0.0
    %672 = vmatmul.mubr.f32.gmra.mxu0 %v397
    %v673 = vpop.f32.mrf.mxu0
    %v674 = vadd.f32 %v391, %v673
    %v675 = vpop.f32.mrf.mxu0
    %676 = vmatprep.mubr.f32.mxu0 0.0
    %677 = vmatmul.mubr.f32.gmra.mxu0 %v400
    %v678 = vpop.f32.mrf.mxu0
    %v679 = vadd.f32 %v391, %v678
    %v680 = vpop.f32.mrf.mxu0
    %681 = vmatprep.mubr.f32.mxu0 0.0
    %682 = vmatmul.mubr.f32.gmra.mxu0 %v403
    %v683 = vpop.f32.mrf.mxu0
    %v684 = vadd.f32 %v391, %v683
    %v685 = vpop.f32.mrf.mxu0
    %686 = vmatprep.mubr.f32.mxu0 0.0
    %687 = vmatmul.mubr.f32.gmra.mxu0 %v406
    %v688 = vpop.f32.mrf.mxu0
    %v689 = vadd.f32 %v391, %v688
    %v690 = vpop.f32.mrf.mxu0
    %691 = vmatprep.mubr.f32.mxu0 0.0
    %692 = vmatmul.mubr.f32.gmra.mxu0 %v409
    %v693 = vpop.f32.mrf.mxu0
    %v694 = vadd.f32 %v391, %v693
    %v695 = vpop.f32.mrf.mxu0
    %696 = vmatprep.mubr.f32.mxu0 0.0
    %697 = vmatmul.mubr.f32.gmra.mxu0 %v412
    %v698 = vpop.f32.mrf.mxu0
    %v699 = vadd.f32 %v391, %v698
    %v700 = vpop.f32.mrf.mxu0
    %701 = vmatprep.mubr.f32.mxu0 0.0
    %702 = vmatmul.mubr.f32.gmra.mxu0 %v415
    %v703 = vpop.f32.mrf.mxu0
    %v704 = vadd.f32 %v391, %v703
    %v705 = vpop.f32.mrf.mxu0
    %706 = vmatprep.mubr.f32.mxu0 0.0
    %707 = vmatmul.mubr.f32.gmra.mxu0 %v418
    %v708 = vpop.f32.mrf.mxu0
    %v709 = vadd.f32 %v391, %v708
    %v710 = vpop.f32.mrf.mxu0
    %711 = vmatprep.mubr.f32.mxu0 0.0
    %712 = vmatmul.mubr.f32.gmra.mxu0 %v421
    %v713 = vpop.f32.mrf.mxu0
    %v714 = vadd.f32 %v391, %v713
    %v715 = vpop.f32.mrf.mxu0
    %716 = vmatprep.mubr.f32.mxu0 0.0
    %717 = vmatmul.mubr.f32.gmra.mxu0 %v424
    %v718 = vpop.f32.mrf.mxu0
    %v719 = vadd.f32 %v391, %v718
    %v720 = vpop.f32.mrf.mxu0
    %721 = vmatprep.mubr.f32.mxu0 0.0
    %722 = vmatmul.mubr.f32.gmra.mxu0 %v427
    %v723 = vpop.f32.mrf.mxu0
    %v724 = vadd.f32 %v391, %v723
    %v725 = vpop.f32.mrf.mxu0
    %726 = vmatprep.mubr.f32.mxu0 0.0
    %727 = vmatmul.mubr.f32.gmra.mxu0 %v430
    %v728 = vpop.f32.mrf.mxu0
    %v729 = vadd.f32 %v391, %v728
    %v730 = vpop.f32.mrf.mxu0
    %731 = vmatprep.mubr.f32.mxu0 0.0
    %732 = vmatmul.mubr.f32.gmra.mxu0 %v433
    %v733 = vpop.f32.mrf.mxu0
    %v734 = vadd.f32 %v391, %v733
    %v735 = vpop.f32.mrf.mxu0
    %736 = vmatprep.mubr.f32.mxu0 0.0
    %737 = vmatmul.mubr.f32.gmra.mxu0 %v436
    %v738 = vpop.f32.mrf.mxu0
    %v739 = vadd.f32 %v391, %v738
    %v740 = vpop.f32.mrf.mxu0
    %741 = vmatprep.mubr.f32.mxu0 0.0
    %742 = vmatmul.mubr.f32.gmra.mxu0 %v439
    %v743 = vpop.f32.mrf.mxu0
    %v744 = vadd.f32 %v391, %v743
    %v745 = vpop.f32.mrf.mxu0
    %746 = vdwg.mxu0
    %747 = vmatprep.subr.mxu0 0.0
    %748 = vmatpush1.xpose.msra.mxu0 %v600
    %749 = vmatprep.subr.mxu0 0.0
    %750 = vmatpush1.xpose.msra.mxu0 %v594
    %751 = vmatprep.subr.mxu0 0.0
    %752 = vmatpush1.xpose.msra.mxu0 %v588
    %753 = vmatprep.subr.mxu0 0.0
    %754 = vmatpush1.xpose.msra.mxu0 %v582
    %755 = vmatprep.subr.mxu0 0.0
    %756 = vmatpush1.xpose.msra.mxu0 %v576
    %757 = vmatprep.subr.mxu0 0.0
    %758 = vmatpush1.xpose.msra.mxu0 %v570
    %759 = vmatprep.subr.mxu0 0.0
    %760 = vmatpush1.xpose.msra.mxu0 %v564
    %761 = vmatprep.subr.mxu0 0.0
    %762 = vmatpush1.xpose.msra.mxu0 %v558
    %763 = vmatprep.subr.mxu0 0.0
    %764 = vmatpush1.xpose.msra.mxu0 %v552
    %765 = vmatprep.subr.mxu0 0.0
    %766 = vmatpush1.xpose.msra.mxu0 %v546
    %767 = vmatprep.subr.mxu0 0.0
    %768 = vmatpush1.xpose.msra.mxu0 %v540
    %769 = vmatprep.subr.mxu0 0.0
    %770 = vmatpush1.xpose.msra.mxu0 %v534
    %771 = vmatprep.subr.mxu0 0.0
    %772 = vmatpush1.xpose.msra.mxu0 %v528
    %773 = vmatprep.subr.mxu0 0.0
    %774 = vmatpush1.xpose.msra.mxu0 %v522
    %775 = vmatprep.subr.mxu0 0.0
    %776 = vmatpush1.xpose.msra.mxu0 %v516
    %777 = vmatprep.subr.mxu0 0.0
    %778 = vmatpush1.xpose.msra.mxu0 %v510
    %779 = vmatprep.subr.mxu0 0.0
    %780 = vmatpush2.xpose.msra.mxu0 0.0
    %781 = vmatprep.subr.mxu0 0.0
    %782 = vmatpush2.xpose.msra.mxu0 0.0
    %783 = vmatprep.subr.mxu0 0.0
    %784 = vmatpush2.xpose.msra.mxu0 0.0
    %785 = vmatprep.subr.mxu0 0.0
    %786 = vmatpush2.xpose.msra.mxu0 0.0
    %787 = vmatprep.subr.mxu0 0.0
    %788 = vmatpush2.xpose.msra.mxu0 0.0
    %789 = vmatprep.subr.mxu0 0.0
    %790 = vmatpush2.xpose.msra.mxu0 0.0
    %791 = vmatprep.subr.mxu0 0.0
    %792 = vmatpush2.xpose.msra.mxu0 0.0
    %793 = vmatprep.subr.mxu0 0.0
    %794 = vmatpush2.xpose.msra.mxu0 0.0
    %795 = vmatprep.subr.mxu0 0.0
    %796 = vmatpush2.xpose.msra.mxu0 0.0
    %797 = vmatprep.subr.mxu0 0.0
    %798 = vmatpush2.xpose.msra.mxu0 0.0
    %799 = vmatprep.subr.mxu0 0.0
    %800 = vmatpush2.xpose.msra.mxu0 0.0
    %801 = vmatprep.subr.mxu0 0.0
    %802 = vmatpush2.xpose.msra.mxu0 0.0
    %803 = vmatprep.subr.mxu0 0.0
    %804 = vmatpush2.xpose.msra.mxu0 0.0
    %805 = vmatprep.subr.mxu0 0.0
    %806 = vmatpush2.xpose.msra.mxu0 0.0
    %807 = vmatprep.subr.mxu0 0.0
    %808 = vmatpush2.xpose.msra.mxu0 0.0
    %809 = vmatprep.subr.mxu0 0.0
    %810 = vmatpush2.xpose.msra.mxu0 0.0
    %811 = vmatprep.mubr.f32.mxu0 0.0
    %812 = vmatmul.mubr.f32.gmra.mxu0 %v508
    %v813 = vpop.f32.mrf.mxu0
    %v814 = vadd.f32 0.0, %v813
    %v815 = vpop.f32.mrf.mxu0
    %816 = vmatprep.mubr.f32.mxu0 0.0
    %817 = vmatmul.mubr.f32.gmra.mxu0 %v514
    %v818 = vpop.f32.mrf.mxu0
    %v819 = vadd.f32 0.0, %v818
    %v820 = vpop.f32.mrf.mxu0
    %821 = vmatprep.mubr.f32.mxu0 0.0
    %822 = vmatmul.mubr.f32.gmra.mxu0 %v520
    %v823 = vpop.f32.mrf.mxu0
    %v824 = vadd.f32 0.0, %v823
    %v825 = vpop.f32.mrf.mxu0
    %826 = vmatprep.mubr.f32.mxu0 0.0
    %827 = vmatmul.mubr.f32.gmra.mxu0 %v526
    %v828 = vpop.f32.mrf.mxu0
    %v829 = vadd.f32 0.0, %v828
    %v830 = vpop.f32.mrf.mxu0
    %831 = vmatprep.mubr.f32.mxu0 0.0
    %832 = vmatmul.mubr.f32.gmra.mxu0 %v532
    %v833 = vpop.f32.mrf.mxu0
    %v834 = vadd.f32 0.0, %v833
    %v835 = vpop.f32.mrf.mxu0
    %836 = vmatprep.mubr.f32.mxu0 0.0
    %837 = vmatmul.mubr.f32.gmra.mxu0 %v538
    %v838 = vpop.f32.mrf.mxu0
    %v839 = vadd.f32 0.0, %v838
    %v840 = vpop.f32.mrf.mxu0
    %841 = vmatprep.mubr.f32.mxu0 0.0
    %842 = vmatmul.mubr.f32.gmra.mxu0 %v544
    %v843 = vpop.f32.mrf.mxu0
    %v844 = vadd.f32 0.0, %v843
    %v845 = vpop.f32.mrf.mxu0
    %846 = vmatprep.mubr.f32.mxu0 0.0
    %847 = vmatmul.mubr.f32.gmra.mxu0 %v550
    %v848 = vpop.f32.mrf.mxu0
    %v849 = vadd.f32 0.0, %v848
    %v850 = vpop.f32.mrf.mxu0
    %851 = vmatprep.mubr.f32.mxu0 0.0
    %852 = vmatmul.mubr.f32.gmra.mxu0 %v556
    %v853 = vpop.f32.mrf.mxu0
    %v854 = vadd.f32 0.0, %v853
    %v855 = vpop.f32.mrf.mxu0
    %856 = vmatprep.mubr.f32.mxu0 0.0
    %857 = vmatmul.mubr.f32.gmra.mxu0 %v562
    %v858 = vpop.f32.mrf.mxu0
    %v859 = vadd.f32 0.0, %v858
    %v860 = vpop.f32.mrf.mxu0
    %861 = vmatprep.mubr.f32.mxu0 0.0
    %862 = vmatmul.mubr.f32.gmra.mxu0 %v568
    %v863 = vpop.f32.mrf.mxu0
    %v864 = vadd.f32 0.0, %v863
    %v865 = vpop.f32.mrf.mxu0
    %866 = vmatprep.mubr.f32.mxu0 0.0
    %867 = vmatmul.mubr.f32.gmra.mxu0 %v574
    %v868 = vpop.f32.mrf.mxu0
    %v869 = vadd.f32 0.0, %v868
    %v870 = vpop.f32.mrf.mxu0
    %871 = vmatprep.mubr.f32.mxu0 0.0
    %872 = vmatmul.mubr.f32.gmra.mxu0 %v580
    %v873 = vpop.f32.mrf.mxu0
    %v874 = vadd.f32 0.0, %v873
    %v875 = vpop.f32.mrf.mxu0
    %876 = vmatprep.mubr.f32.mxu0 0.0
    %877 = vmatmul.mubr.f32.gmra.mxu0 %v586
    %v878 = vpop.f32.mrf.mxu0
    %v879 = vadd.f32 0.0, %v878
    %v880 = vpop.f32.mrf.mxu0
    %881 = vmatprep.mubr.f32.mxu0 0.0
    %882 = vmatmul.mubr.f32.gmra.mxu0 %v592
    %v883 = vpop.f32.mrf.mxu0
    %v884 = vadd.f32 0.0, %v883
    %v885 = vpop.f32.mrf.mxu0
    %886 = vmatprep.mubr.f32.mxu0 0.0
    %887 = vmatmul.mubr.f32.gmra.mxu0 %v598
    %v888 = vpop.f32.mrf.mxu0
    %v889 = vadd.f32 0.0, %v888
    %v890 = vpop.f32.mrf.mxu0
    %891 = vdwg.mxu0
    %v892 = vmul.f32 %v814, 0.17677669
    %v893 = vmul.f32 %v819, 0.17677669
    %v894 = vmul.f32 %v824, 0.17677669
    %v895 = vmul.f32 %v829, 0.17677669
    %v896 = vmul.f32 %v834, 0.17677669
    %v897 = vmul.f32 %v839, 0.17677669
    %v898 = vmul.f32 %v844, 0.17677669
    %v899 = vmul.f32 %v849, 0.17677669
    %v900 = vmul.f32 %v854, 0.17677669
    %v901 = vmul.f32 %v859, 0.17677669
    %v902 = vmul.f32 %v864, 0.17677669
    %v903 = vmul.f32 %v869, 0.17677669
    %v904 = vmul.f32 %v874, 0.17677669
    %v905 = vmul.f32 %v879, 0.17677669
    %v906 = vmul.f32 %v884, 0.17677669
    %v907 = vmul.f32 %v889, 0.17677669
    %v908 = vld [vmem:[#allocation6] sm:$0xff]
    %v909 = vld [vmem:[#allocation6 + $0x8] sm:$0xff]
    %v910 = vld [vmem:[#allocation6 + $0x10] sm:$0xff]
    %v911 = vld [vmem:[#allocation6 + $0x18] sm:$0xff]
    %v912 = vld [vmem:[#allocation6 + $0x20] sm:$0xff]
    %v913 = vld [vmem:[#allocation6 + $0x28] sm:$0xff]
    %v914 = vld [vmem:[#allocation6 + $0x30] sm:$0xff]
    %v915 = vld [vmem:[#allocation6 + $0x38] sm:$0xff]
    %v916 = vld [vmem:[#allocation6 + $0x40] sm:$0xff]
    %v917 = vld [vmem:[#allocation6 + $0x48] sm:$0xff]
    %v918 = vld [vmem:[#allocation6 + $0x50] sm:$0xff]
    %v919 = vld [vmem:[#allocation6 + $0x58] sm:$0xff]
    %v920 = vld [vmem:[#allocation6 + $0x60] sm:$0xff]
    %v921 = vld [vmem:[#allocation6 + $0x68] sm:$0xff]
    %v922 = vld [vmem:[#allocation6 + $0x70] sm:$0xff]
    %v923 = vld [vmem:[#allocation6 + $0x78] sm:$0xff]
    %v924 = vadd.f32 %v892, %v908
    %v925 = vadd.f32 %v893, %v909
    %v926 = vadd.f32 %v894, %v910
    %v927 = vadd.f32 %v895, %v911
    %v928 = vadd.f32 %v896, %v912
    %v929 = vadd.f32 %v897, %v913
    %v930 = vadd.f32 %v898, %v914
    %v931 = vadd.f32 %v899, %v915
    %v932 = vadd.f32 %v900, %v916
    %v933 = vadd.f32 %v901, %v917
    %v934 = vadd.f32 %v902, %v918
    %v935 = vadd.f32 %v903, %v919
    %v936 = vadd.f32 %v904, %v920
    %v937 = vadd.f32 %v905, %v921
    %v938 = vadd.f32 %v906, %v922
    %v939 = vadd.f32 %v907, %v923
    %940 = vmax.xlane.f32.xlu0 %v924
    %v941 = vpop.xlane.xlu0 %940
    %942 = vmax.xlane.f32.xlu0 %v925
    %v943 = vpop.xlane.xlu0 %942
    %944 = vmax.xlane.f32.xlu0 %v926
    %v945 = vpop.xlane.xlu0 %944
    %946 = vmax.xlane.f32.xlu0 %v927
    %v947 = vpop.xlane.xlu0 %946
    %948 = vmax.xlane.f32.xlu0 %v928
    %v949 = vpop.xlane.xlu0 %948
    %950 = vmax.xlane.f32.xlu0 %v929
    %v951 = vpop.xlane.xlu0 %950
    %952 = vmax.xlane.f32.xlu0 %v930
    %v953 = vpop.xlane.xlu0 %952
    %954 = vmax.xlane.f32.xlu0 %v931
    %v955 = vpop.xlane.xlu0 %954
    %956 = vmax.xlane.f32.xlu0 %v932
    %v957 = vpop.xlane.xlu0 %956
    %958 = vmax.xlane.f32.xlu0 %v933
    %v959 = vpop.xlane.xlu0 %958
    %960 = vmax.xlane.f32.xlu0 %v934
    %v961 = vpop.xlane.xlu0 %960
    %962 = vmax.xlane.f32.xlu0 %v935
    %v963 = vpop.xlane.xlu0 %962
    %964 = vmax.xlane.f32.xlu0 %v936
    %v965 = vpop.xlane.xlu0 %964
    %966 = vmax.xlane.f32.xlu0 %v937
    %v967 = vpop.xlane.xlu0 %966
    %968 = vmax.xlane.f32.xlu0 %v938
    %v969 = vpop.xlane.xlu0 %968
    %970 = vmax.xlane.f32.xlu0 %v939
    %v971 = vpop.xlane.xlu0 %970
    %v972 = vsub.f32 %v924, %v941
    %v973 = vsub.f32 %v925, %v943
    %v974 = vsub.f32 %v926, %v945
    %v975 = vsub.f32 %v927, %v947
    %v976 = vsub.f32 %v928, %v949
    %v977 = vsub.f32 %v929, %v951
    %v978 = vsub.f32 %v930, %v953
    %v979 = vsub.f32 %v931, %v955
    %v980 = vsub.f32 %v932, %v957
    %v981 = vsub.f32 %v933, %v959
    %v982 = vsub.f32 %v934, %v961
    %v983 = vsub.f32 %v935, %v963
    %v984 = vsub.f32 %v936, %v965
    %v985 = vsub.f32 %v937, %v967
    %v986 = vsub.f32 %v938, %v969
    %v987 = vsub.f32 %v939, %v971
    %v988 = vmul.f32 %v972, 1.442695
    %v989 = vpow.pop %v988
    %v990 = vmul.f32 %v973, 1.442695
    %v991 = vpow.pop %v990
    %v992 = vmul.f32 %v974, 1.442695
    %v993 = vpow.pop %v992
    %v994 = vmul.f32 %v975, 1.442695
    %v995 = vpow.pop %v994
    %v996 = vmul.f32 %v976, 1.442695
    %v997 = vpow.pop %v996
    %v998 = vmul.f32 %v977, 1.442695
    %v999 = vpow.pop %v998
    %v1000 = vmul.f32 %v978, 1.442695
    %v1001 = vpow.pop %v1000
    %v1002 = vmul.f32 %v979, 1.442695
    %v1003 = vpow.pop %v1002
    %v1004 = vmul.f32 %v980, 1.442695
    %v1005 = vpow.pop %v1004
    %v1006 = vmul.f32 %v981, 1.442695
    %v1007 = vpow.pop %v1006
    %v1008 = vmul.f32 %v982, 1.442695
    %v1009 = vpow.pop %v1008
    %v1010 = vmul.f32 %v983, 1.442695
    %v1011 = vpow.pop %v1010
    %v1012 = vmul.f32 %v984, 1.442695
    %v1013 = vpow.pop %v1012
    %v1014 = vmul.f32 %v985, 1.442695
    %v1015 = vpow.pop %v1014
    %v1016 = vmul.f32 %v986, 1.442695
    %v1017 = vpow.pop %v1016
    %v1018 = vmul.f32 %v987, 1.442695
    %v1019 = vpow.pop %v1018
    %1020 = vadd.xlane.f32.xlu0 %v989
    %v1021 = vpop.xlane.xlu0 %1020
    %1022 = vadd.xlane.f32.xlu0 %v991
    %v1023 = vpop.xlane.xlu0 %1022
    %1024 = vadd.xlane.f32.xlu0 %v993
    %v1025 = vpop.xlane.xlu0 %1024
    %1026 = vadd.xlane.f32.xlu0 %v995
    %v1027 = vpop.xlane.xlu0 %1026
    %1028 = vadd.xlane.f32.xlu0 %v997
    %v1029 = vpop.xlane.xlu0 %1028
    %1030 = vadd.xlane.f32.xlu0 %v999
    %v1031 = vpop.xlane.xlu0 %1030
    %1032 = vadd.xlane.f32.xlu0 %v1001
    %v1033 = vpop.xlane.xlu0 %1032
    %1034 = vadd.xlane.f32.xlu0 %v1003
    %v1035 = vpop.xlane.xlu0 %1034
    %1036 = vadd.xlane.f32.xlu0 %v1005
    %v1037 = vpop.xlane.xlu0 %1036
    %1038 = vadd.xlane.f32.xlu0 %v1007
    %v1039 = vpop.xlane.xlu0 %1038
    %1040 = vadd.xlane.f32.xlu0 %v1009
    %v1041 = vpop.xlane.xlu0 %1040
    %1042 = vadd.xlane.f32.xlu0 %v1011
    %v1043 = vpop.xlane.xlu0 %1042
    %1044 = vadd.xlane.f32.xlu0 %v1013
    %v1045 = vpop.xlane.xlu0 %1044
    %1046 = vadd.xlane.f32.xlu0 %v1015
    %v1047 = vpop.xlane.xlu0 %1046
    %1048 = vadd.xlane.f32.xlu0 %v1017
    %v1049 = vpop.xlane.xlu0 %1048
    %1050 = vadd.xlane.f32.xlu0 %v1019
    %v1051 = vpop.xlane.xlu0 %1050
    %v1052 = vrcp.pop %v1021
    %v1053 = vmul.f32 %v989, %v1052
    %v1054 = vrcp.pop %v1023
    %v1055 = vmul.f32 %v991, %v1054
    %v1056 = vrcp.pop %v1025
    %v1057 = vmul.f32 %v993, %v1056
    %v1058 = vrcp.pop %v1027
    %v1059 = vmul.f32 %v995, %v1058
    %v1060 = vrcp.pop %v1029
    %v1061 = vmul.f32 %v997, %v1060
    %v1062 = vrcp.pop %v1031
    %v1063 = vmul.f32 %v999, %v1062
    %v1064 = vrcp.pop %v1033
    %v1065 = vmul.f32 %v1001, %v1064
    %v1066 = vrcp.pop %v1035
    %v1067 = vmul.f32 %v1003, %v1066
    %v1068 = vrcp.pop %v1037
    %v1069 = vmul.f32 %v1005, %v1068
    %v1070 = vrcp.pop %v1039
    %v1071 = vmul.f32 %v1007, %v1070
    %v1072 = vrcp.pop %v1041
    %v1073 = vmul.f32 %v1009, %v1072
    %v1074 = vrcp.pop %v1043
    %v1075 = vmul.f32 %v1011, %v1074
    %v1076 = vrcp.pop %v1045
    %v1077 = vmul.f32 %v1013, %v1076
    %v1078 = vrcp.pop %v1047
    %v1079 = vmul.f32 %v1015, %v1078
    %v1080 = vrcp.pop %v1049
    %v1081 = vmul.f32 %v1017, %v1080
    %v1082 = vrcp.pop %v1051
    %v1083 = vmul.f32 %v1019, %v1082
    %1084 = vmatprep.subr.mxu0 0.0
    %1085 = vmatpush1.msra.mxu0 %v744
    %1086 = vmatprep.subr.mxu0 0.0
    %1087 = vmatpush1.msra.mxu0 %v739
    %1088 = vmatprep.subr.mxu0 0.0
    %1089 = vmatpush1.msra.mxu0 %v734
    %1090 = vmatprep.subr.mxu0 0.0
    %1091 = vmatpush1.msra.mxu0 %v729
    %1092 = vmatprep.subr.mxu0 0.0
    %1093 = vmatpush1.msra.mxu0 %v724
    %1094 = vmatprep.subr.mxu0 0.0
    %1095 = vmatpush1.msra.mxu0 %v719
    %1096 = vmatprep.subr.mxu0 0.0
    %1097 = vmatpush1.msra.mxu0 %v714
    %1098 = vmatprep.subr.mxu0 0.0
    %1099 = vmatpush1.msra.mxu0 %v709
    %1100 = vmatprep.subr.mxu0 0.0
    %1101 = vmatpush1.msra.mxu0 %v704
    %1102 = vmatprep.subr.mxu0 0.0
    %1103 = vmatpush1.msra.mxu0 %v699
    %1104 = vmatprep.subr.mxu0 0.0
    %1105 = vmatpush1.msra.mxu0 %v694
    %1106 = vmatprep.subr.mxu0 0.0
    %1107 = vmatpush1.msra.mxu0 %v689
    %1108 = vmatprep.subr.mxu0 0.0
    %1109 = vmatpush1.msra.mxu0 %v684
    %1110 = vmatprep.subr.mxu0 0.0
    %1111 = vmatpush1.msra.mxu0 %v679
    %1112 = vmatprep.subr.mxu0 0.0
    %1113 = vmatpush1.msra.mxu0 %v674
    %1114 = vmatprep.subr.mxu0 0.0
    %1115 = vmatpush1.msra.mxu0 %v669
    %1116 = vmatprep.subr.mxu0 0.0
    %1117 = vmatpush2.msra.mxu0 0.0
    %1118 = vmatprep.subr.mxu0 0.0
    %1119 = vmatpush2.msra.mxu0 0.0
    %1120 = vmatprep.subr.mxu0 0.0
    %1121 = vmatpush2.msra.mxu0 0.0
    %1122 = vmatprep.subr.mxu0 0.0
    %1123 = vmatpush2.msra.mxu0 0.0
    %1124 = vmatprep.subr.mxu0 0.0
    %1125 = vmatpush2.msra.mxu0 0.0
    %1126 = vmatprep.subr.mxu0 0.0
    %1127 = vmatpush2.msra.mxu0 0.0
    %1128 = vmatprep.subr.mxu0 0.0
    %1129 = vmatpush2.msra.mxu0 0.0
    %1130 = vmatprep.subr.mxu0 0.0
    %1131 = vmatpush2.msra.mxu0 0.0
    %1132 = vmatprep.subr.mxu0 0.0
    %1133 = vmatpush2.msra.mxu0 0.0
    %1134 = vmatprep.subr.mxu0 0.0
    %1135 = vmatpush2.msra.mxu0 0.0
    %1136 = vmatprep.subr.mxu0 0.0
    %1137 = vmatpush2.msra.mxu0 0.0
    %1138 = vmatprep.subr.mxu0 0.0
    %1139 = vmatpush2.msra.mxu0 0.0
    %1140 = vmatprep.subr.mxu0 0.0
    %1141 = vmatpush2.msra.mxu0 0.0
    %1142 = vmatprep.subr.mxu0 0.0
    %1143 = vmatpush2.msra.mxu0 0.0
    %1144 = vmatprep.subr.mxu0 0.0
    %1145 = vmatpush2.msra.mxu0 0.0
    %1146 = vmatprep.subr.mxu0 0.0
    %1147 = vmatpush2.msra.mxu0 0.0
    %1148 = vmatprep.mubr.f32.mxu0 0.0
    %1149 = vmatmul.mubr.f32.gmra.mxu0 %v1053
    %v1150 = vpop.f32.mrf.mxu0
    %v1151 = vadd.f32 0.0, %v1150
    %v1152 = vpop.f32.mrf.mxu0
    %1153 = vmatprep.mubr.f32.mxu0 0.0
    %1154 = vmatmul.mubr.f32.gmra.mxu0 %v1055
    %v1155 = vpop.f32.mrf.mxu0
    %v1156 = vadd.f32 0.0, %v1155
    %v1157 = vpop.f32.mrf.mxu0
    %1158 = vmatprep.mubr.f32.mxu0 0.0
    %1159 = vmatmul.mubr.f32.gmra.mxu0 %v1057
    %v1160 = vpop.f32.mrf.mxu0
    %v1161 = vadd.f32 0.0, %v1160
    %v1162 = vpop.f32.mrf.mxu0
    %1163 = vmatprep.mubr.f32.mxu0 0.0
    %1164 = vmatmul.mubr.f32.gmra.mxu0 %v1059
    %v1165 = vpop.f32.mrf.mxu0
    %v1166 = vadd.f32 0.0, %v1165
    %v1167 = vpop.f32.mrf.mxu0
    %1168 = vmatprep.mubr.f32.mxu0 0.0
    %1169 = vmatmul.mubr.f32.gmra.mxu0 %v1061
    %v1170 = vpop.f32.mrf.mxu0
    %v1171 = vadd.f32 0.0, %v1170
    %v1172 = vpop.f32.mrf.mxu0
    %1173 = vmatprep.mubr.f32.mxu0 0.0
    %1174 = vmatmul.mubr.f32.gmra.mxu0 %v1063
    %v1175 = vpop.f32.mrf.mxu0
    %v1176 = vadd.f32 0.0, %v1175
    %v1177 = vpop.f32.mrf.mxu0
    %1178 = vmatprep.mubr.f32.mxu0 0.0
    %1179 = vmatmul.mubr.f32.gmra.mxu0 %v1065
    %v1180 = vpop.f32.mrf.mxu0
    %v1181 = vadd.f32 0.0, %v1180
    %v1182 = vpop.f32.mrf.mxu0
    %1183 = vmatprep.mubr.f32.mxu0 0.0
    %1184 = vmatmul.mubr.f32.gmra.mxu0 %v1067
    %v1185 = vpop.f32.mrf.mxu0
    %v1186 = vadd.f32 0.0, %v1185
    %v1187 = vpop.f32.mrf.mxu0
    %1188 = vmatprep.mubr.f32.mxu0 0.0
    %1189 = vmatmul.mubr.f32.gmra.mxu0 %v1069
    %v1190 = vpop.f32.mrf.mxu0
    %v1191 = vadd.f32 0.0, %v1190
    %v1192 = vpop.f32.mrf.mxu0
    %1193 = vmatprep.mubr.f32.mxu0 0.0
    %1194 = vmatmul.mubr.f32.gmra.mxu0 %v1071
    %v1195 = vpop.f32.mrf.mxu0
    %v1196 = vadd.f32 0.0, %v1195
    %v1197 = vpop.f32.mrf.mxu0
    %1198 = vmatprep.mubr.f32.mxu0 0.0
    %1199 = vmatmul.mubr.f32.gmra.mxu0 %v1073
    %v1200 = vpop.f32.mrf.mxu0
    %v1201 = vadd.f32 0.0, %v1200
    %v1202 = vpop.f32.mrf.mxu0
    %1203 = vmatprep.mubr.f32.mxu0 0.0
    %1204 = vmatmul.mubr.f32.gmra.mxu0 %v1075
    %v1205 = vpop.f32.mrf.mxu0
    %v1206 = vadd.f32 0.0, %v1205
    %v1207 = vpop.f32.mrf.mxu0
    %1208 = vmatprep.mubr.f32.mxu0 0.0
    %1209 = vmatmul.mubr.f32.gmra.mxu0 %v1077
    %v1210 = vpop.f32.mrf.mxu0
    %v1211 = vadd.f32 0.0, %v1210
    %v1212 = vpop.f32.mrf.mxu0
    %1213 = vmatprep.mubr.f32.mxu0 0.0
    %1214 = vmatmul.mubr.f32.gmra.mxu0 %v1079
    %v1215 = vpop.f32.mrf.mxu0
    %v1216 = vadd.f32 0.0, %v1215
    %v1217 = vpop.f32.mrf.mxu0
    %1218 = vmatprep.mubr.f32.mxu0 0.0
    %1219 = vmatmul.mubr.f32.gmra.mxu0 %v1081
    %v1220 = vpop.f32.mrf.mxu0
    %v1221 = vadd.f32 0.0, %v1220
    %v1222 = vpop.f32.mrf.mxu0
    %1223 = vmatprep.mubr.f32.mxu0 0.0
    %1224 = vmatmul.mubr.f32.gmra.mxu0 %v1083
    %v1225 = vpop.f32.mrf.mxu0
    %v1226 = vadd.f32 0.0, %v1225
    %v1227 = vpop.f32.mrf.mxu0
    %1228 = vdwg.mxu0
    %v1229 = vlaneseq
    %v1230 = vshrl.u32 %v1229, 7
    %v1231 = vsub.s32 0, %v1230
    %v1232 = vrot.slane %v174, %v1231
    %1233 = vmatprep.subr.mxu0 0.0
    %1234 = vmatpush1.msra.mxu0 %v115
    %1235 = vmatprep.subr.mxu0 0.0
    %1236 = vmatpush1.msra.mxu0 %v114
    %1237 = vmatprep.subr.mxu0 0.0
    %1238 = vmatpush1.msra.mxu0 %v113
    %1239 = vmatprep.subr.mxu0 0.0
    %1240 = vmatpush1.msra.mxu0 %v112
    %1241 = vmatprep.subr.mxu0 0.0
    %1242 = vmatpush1.msra.mxu0 %v111
    %1243 = vmatprep.subr.mxu0 0.0
    %1244 = vmatpush1.msra.mxu0 %v110
    %1245 = vmatprep.subr.mxu0 0.0
    %1246 = vmatpush1.msra.mxu0 %v109
    %1247 = vmatprep.subr.mxu0 0.0
    %1248 = vmatpush1.msra.mxu0 %v108
    %1249 = vmatprep.subr.mxu0 0.0
    %1250 = vmatpush1.msra.mxu0 %v107
    %1251 = vmatprep.subr.mxu0 0.0
    %1252 = vmatpush1.msra.mxu0 %v106
    %1253 = vmatprep.subr.mxu0 0.0
    %1254 = vmatpush1.msra.mxu0 %v105
    %1255 = vmatprep.subr.mxu0 0.0
    %1256 = vmatpush1.msra.mxu0 %v104
    %1257 = vmatprep.subr.mxu0 0.0
    %1258 = vmatpush1.msra.mxu0 %v103
    %1259 = vmatprep.subr.mxu0 0.0
    %1260 = vmatpush1.msra.mxu0 %v102
    %1261 = vmatprep.subr.mxu0 0.0
    %1262 = vmatpush1.msra.mxu0 %v101
    %1263 = vmatprep.subr.mxu0 0.0
    %1264 = vmatpush1.msra.mxu0 %v100
    %1265 = vmatprep.subr.mxu0 0.0
    %1266 = vmatpush2.msra.mxu0 0.0
    %1267 = vmatprep.subr.mxu0 0.0
    %1268 = vmatpush2.msra.mxu0 0.0
    %1269 = vmatprep.subr.mxu0 0.0
    %1270 = vmatpush2.msra.mxu0 0.0
    %1271 = vmatprep.subr.mxu0 0.0
    %1272 = vmatpush2.msra.mxu0 0.0
    %1273 = vmatprep.subr.mxu0 0.0
    %1274 = vmatpush2.msra.mxu0 0.0
    %1275 = vmatprep.subr.mxu0 0.0
    %1276 = vmatpush2.msra.mxu0 0.0
    %1277 = vmatprep.subr.mxu0 0.0
    %1278 = vmatpush2.msra.mxu0 0.0
    %1279 = vmatprep.subr.mxu0 0.0
    %1280 = vmatpush2.msra.mxu0 0.0
    %1281 = vmatprep.subr.mxu0 0.0
    %1282 = vmatpush2.msra.mxu0 0.0
    %1283 = vmatprep.subr.mxu0 0.0
    %1284 = vmatpush2.msra.mxu0 0.0
    %1285 = vmatprep.subr.mxu0 0.0
    %1286 = vmatpush2.msra.mxu0 0.0
    %1287 = vmatprep.subr.mxu0 0.0
    %1288 = vmatpush2.msra.mxu0 0.0
    %1289 = vmatprep.subr.mxu0 0.0
    %1290 = vmatpush2.msra.mxu0 0.0
    %1291 = vmatprep.subr.mxu0 0.0
    %1292 = vmatpush2.msra.mxu0 0.0
    %1293 = vmatprep.subr.mxu0 0.0
    %1294 = vmatpush2.msra.mxu0 0.0
    %1295 = vmatprep.subr.mxu0 0.0
    %1296 = vmatpush2.msra.mxu0 0.0
    %1297 = vmatprep.mubr.f32.mxu0 0.0
    %1298 = vmatmul.mubr.f32.gmra.mxu0 %v1151
    %v1299 = vpop.f32.mrf.mxu0
    %v1300 = vadd.f32 %v1232, %v1299
    %v1301 = vpop.f32.mrf.mxu0
    %1302 = vmatprep.mubr.f32.mxu0 0.0
    %1303 = vmatmul.mubr.f32.gmra.mxu0 %v1156
    %v1304 = vpop.f32.mrf.mxu0
    %v1305 = vadd.f32 %v1232, %v1304
    %v1306 = vpop.f32.mrf.mxu0
    %1307 = vmatprep.mubr.f32.mxu0 0.0
    %1308 = vmatmul.mubr.f32.gmra.mxu0 %v1161
    %v1309 = vpop.f32.mrf.mxu0
    %v1310 = vadd.f32 %v1232, %v1309
    %v1311 = vpop.f32.mrf.mxu0
    %1312 = vmatprep.mubr.f32.mxu0 0.0
    %1313 = vmatmul.mubr.f32.gmra.mxu0 %v1166
    %v1314 = vpop.f32.mrf.mxu0
    %v1315 = vadd.f32 %v1232, %v1314
    %v1316 = vpop.f32.mrf.mxu0
    %1317 = vmatprep.mubr.f32.mxu0 0.0
    %1318 = vmatmul.mubr.f32.gmra.mxu0 %v1171
    %v1319 = vpop.f32.mrf.mxu0
    %v1320 = vadd.f32 %v1232, %v1319
    %v1321 = vpop.f32.mrf.mxu0
    %1322 = vmatprep.mubr.f32.mxu0 0.0
    %1323 = vmatmul.mubr.f32.gmra.mxu0 %v1176
    %v1324 = vpop.f32.mrf.mxu0
    %v1325 = vadd.f32 %v1232, %v1324
    %v1326 = vpop.f32.mrf.mxu0
    %1327 = vmatprep.mubr.f32.mxu0 0.0
    %1328 = vmatmul.mubr.f32.gmra.mxu0 %v1181
    %v1329 = vpop.f32.mrf.mxu0
    %v1330 = vadd.f32 %v1232, %v1329
    %v1331 = vpop.f32.mrf.mxu0
    %1332 = vmatprep.mubr.f32.mxu0 0.0
    %1333 = vmatmul.mubr.f32.gmra.mxu0 %v1186
    %v1334 = vpop.f32.mrf.mxu0
    %v1335 = vadd.f32 %v1232, %v1334
    %v1336 = vpop.f32.mrf.mxu0
    %1337 = vmatprep.mubr.f32.mxu0 0.0
    %1338 = vmatmul.mubr.f32.gmra.mxu0 %v1191
    %v1339 = vpop.f32.mrf.mxu0
    %v1340 = vadd.f32 %v1232, %v1339
    %v1341 = vpop.f32.mrf.mxu0
    %1342 = vmatprep.mubr.f32.mxu0 0.0
    %1343 = vmatmul.mubr.f32.gmra.mxu0 %v1196
    %v1344 = vpop.f32.mrf.mxu0
    %v1345 = vadd.f32 %v1232, %v1344
    %v1346 = vpop.f32.mrf.mxu0
    %1347 = vmatprep.mubr.f32.mxu0 0.0
    %1348 = vmatmul.mubr.f32.gmra.mxu0 %v1201
    %v1349 = vpop.f32.mrf.mxu0
    %v1350 = vadd.f32 %v1232, %v1349
    %v1351 = vpop.f32.mrf.mxu0
    %1352 = vmatprep.mubr.f32.mxu0 0.0
    %1353 = vmatmul.mubr.f32.gmra.mxu0 %v1206
    %v1354 = vpop.f32.mrf.mxu0
    %v1355 = vadd.f32 %v1232, %v1354
    %v1356 = vpop.f32.mrf.mxu0
    %1357 = vmatprep.mubr.f32.mxu0 0.0
    %1358 = vmatmul.mubr.f32.gmra.mxu0 %v1211
    %v1359 = vpop.f32.mrf.mxu0
    %v1360 = vadd.f32 %v1232, %v1359
    %v1361 = vpop.f32.mrf.mxu0
    %1362 = vmatprep.mubr.f32.mxu0 0.0
    %1363 = vmatmul.mubr.f32.gmra.mxu0 %v1216
    %v1364 = vpop.f32.mrf.mxu0
    %v1365 = vadd.f32 %v1232, %v1364
    %v1366 = vpop.f32.mrf.mxu0
    %1367 = vmatprep.mubr.f32.mxu0 0.0
    %1368 = vmatmul.mubr.f32.gmra.mxu0 %v1221
    %v1369 = vpop.f32.mrf.mxu0
    %v1370 = vadd.f32 %v1232, %v1369
    %v1371 = vpop.f32.mrf.mxu0
    %1372 = vmatprep.mubr.f32.mxu0 0.0
    %1373 = vmatmul.mubr.f32.gmra.mxu0 %v1226
    %v1374 = vpop.f32.mrf.mxu0
    %v1375 = vadd.f32 %v1232, %v1374
    %v1376 = vpop.f32.mrf.mxu0
    %1377 = vdwg.mxu0
    %v1378 = vadd.f32 %v302, %v1300
    %v1379 = vadd.f32 %v307, %v1305
    %v1380 = vadd.f32 %v312, %v1310
    %v1381 = vadd.f32 %v317, %v1315
    %v1382 = vadd.f32 %v322, %v1320
    %v1383 = vadd.f32 %v327, %v1325
    %v1384 = vadd.f32 %v332, %v1330
    %v1385 = vadd.f32 %v337, %v1335
    %v1386 = vadd.f32 %v342, %v1340
    %v1387 = vadd.f32 %v347, %v1345
    %v1388 = vadd.f32 %v352, %v1350
    %v1389 = vadd.f32 %v357, %v1355
    %v1390 = vadd.f32 %v362, %v1360
    %v1391 = vadd.f32 %v367, %v1365
    %v1392 = vadd.f32 %v372, %v1370
    %v1393 = vadd.f32 %v377, %v1375
    %v1394 = vsel %vm392, %v1378, 0.0
    %1395 = vadd.xlane.f32.xlu0 %v1394
    %v1396 = vpop.xlane.xlu0 %1395
    %v1397 = vsel %vm392, %v1379, 0.0
    %1398 = vadd.xlane.f32.xlu0 %v1397
    %v1399 = vpop.xlane.xlu0 %1398
    %v1400 = vsel %vm392, %v1380, 0.0
    %1401 = vadd.xlane.f32.xlu0 %v1400
    %v1402 = vpop.xlane.xlu0 %1401
    %v1403 = vsel %vm392, %v1381, 0.0
    %1404 = vadd.xlane.f32.xlu0 %v1403
    %v1405 = vpop.xlane.xlu0 %1404
    %v1406 = vsel %vm392, %v1382, 0.0
    %1407 = vadd.xlane.f32.xlu0 %v1406
    %v1408 = vpop.xlane.xlu0 %1407
    %v1409 = vsel %vm392, %v1383, 0.0
    %1410 = vadd.xlane.f32.xlu0 %v1409
    %v1411 = vpop.xlane.xlu0 %1410
    %v1412 = vsel %vm392, %v1384, 0.0
    %1413 = vadd.xlane.f32.xlu0 %v1412
    %v1414 = vpop.xlane.xlu0 %1413
    %v1415 = vsel %vm392, %v1385, 0.0
    %1416 = vadd.xlane.f32.xlu0 %v1415
    %v1417 = vpop.xlane.xlu0 %1416
    %v1418 = vsel %vm392, %v1386, 0.0
    %1419 = vadd.xlane.f32.xlu0 %v1418
    %v1420 = vpop.xlane.xlu0 %1419
    %v1421 = vsel %vm392, %v1387, 0.0
    %1422 = vadd.xlane.f32.xlu0 %v1421
    %v1423 = vpop.xlane.xlu0 %1422
    %v1424 = vsel %vm392, %v1388, 0.0
    %1425 = vadd.xlane.f32.xlu0 %v1424
    %v1426 = vpop.xlane.xlu0 %1425
    %v1427 = vsel %vm392, %v1389, 0.0
    %1428 = vadd.xlane.f32.xlu0 %v1427
    %v1429 = vpop.xlane.xlu0 %1428
    %v1430 = vsel %vm392, %v1390, 0.0
    %1431 = vadd.xlane.f32.xlu0 %v1430
    %v1432 = vpop.xlane.xlu0 %1431
    %v1433 = vsel %vm392, %v1391, 0.0
    %1434 = vadd.xlane.f32.xlu0 %v1433
    %v1435 = vpop.xlane.xlu0 %1434
    %v1436 = vsel %vm392, %v1392, 0.0
    %1437 = vadd.xlane.f32.xlu0 %v1436
    %v1438 = vpop.xlane.xlu0 %1437
    %v1439 = vsel %vm392, %v1393, 0.0
    %1440 = vadd.xlane.f32.xlu0 %v1439
    %v1441 = vpop.xlane.xlu0 %1440
    %v1442 = vrcp.pop 32.0
    %v1443 = vmul.f32 %v1396, %v1442
    %v1444 = vmul.f32 %v1399, %v1442
    %v1445 = vmul.f32 %v1402, %v1442
    %v1446 = vmul.f32 %v1405, %v1442
    %v1447 = vmul.f32 %v1408, %v1442
    %v1448 = vmul.f32 %v1411, %v1442
    %v1449 = vmul.f32 %v1414, %v1442
    %v1450 = vmul.f32 %v1417, %v1442
    %v1451 = vmul.f32 %v1420, %v1442
    %v1452 = vmul.f32 %v1423, %v1442
    %v1453 = vmul.f32 %v1426, %v1442
    %v1454 = vmul.f32 %v1429, %v1442
    %v1455 = vmul.f32 %v1432, %v1442
    %v1456 = vmul.f32 %v1435, %v1442
    %v1457 = vmul.f32 %v1438, %v1442
    %v1458 = vmul.f32 %v1441, %v1442
    %v1459 = vsub.f32 %v1378, %v1443
    %v1460 = vsub.f32 %v1379, %v1444
    %v1461 = vsub.f32 %v1380, %v1445
    %v1462 = vsub.f32 %v1381, %v1446
    %v1463 = vsub.f32 %v1382, %v1447
    %v1464 = vsub.f32 %v1383, %v1448
    %v1465 = vsub.f32 %v1384, %v1449
    %v1466 = vsub.f32 %v1385, %v1450
    %v1467 = vsub.f32 %v1386, %v1451
    %v1468 = vsub.f32 %v1387, %v1452
    %v1469 = vsub.f32 %v1388, %v1453
    %v1470 = vsub.f32 %v1389, %v1454
    %v1471 = vsub.f32 %v1390, %v1455
    %v1472 = vsub.f32 %v1391, %v1456
    %v1473 = vsub.f32 %v1392, %v1457
    %v1474 = vsub.f32 %v1393, %v1458
    %v1475 = vmul.f32 %v1459, %v1459
    %v1476 = vmul.f32 %v1460, %v1460
    %v1477 = vmul.f32 %v1461, %v1461
    %v1478 = vmul.f32 %v1462, %v1462
    %v1479 = vmul.f32 %v1463, %v1463
    %v1480 = vmul.f32 %v1464, %v1464
    %v1481 = vmul.f32 %v1465, %v1465
    %v1482 = vmul.f32 %v1466, %v1466
    %v1483 = vmul.f32 %v1467, %v1467
    %v1484 = vmul.f32 %v1468, %v1468
    %v1485 = vmul.f32 %v1469, %v1469
    %v1486 = vmul.f32 %v1470, %v1470
    %v1487 = vmul.f32 %v1471, %v1471
    %v1488 = vmul.f32 %v1472, %v1472
    %v1489 = vmul.f32 %v1473, %v1473
    %v1490 = vmul.f32 %v1474, %v1474
    %v1491 = vsel %vm392, %v1475, 0.0
    %1492 = vadd.xlane.f32.xlu0 %v1491
    %v1493 = vpop.xlane.xlu0 %1492
    %v1494 = vsel %vm392, %v1476, 0.0
    %1495 = vadd.xlane.f32.xlu0 %v1494
    %v1496 = vpop.xlane.xlu0 %1495
    %v1497 = vsel %vm392, %v1477, 0.0
    %1498 = vadd.xlane.f32.xlu0 %v1497
    %v1499 = vpop.xlane.xlu0 %1498
    %v1500 = vsel %vm392, %v1478, 0.0
    %1501 = vadd.xlane.f32.xlu0 %v1500
    %v1502 = vpop.xlane.xlu0 %1501
    %v1503 = vsel %vm392, %v1479, 0.0
    %1504 = vadd.xlane.f32.xlu0 %v1503
    %v1505 = vpop.xlane.xlu0 %1504
    %v1506 = vsel %vm392, %v1480, 0.0
    %1507 = vadd.xlane.f32.xlu0 %v1506
    %v1508 = vpop.xlane.xlu0 %1507
    %v1509 = vsel %vm392, %v1481, 0.0
    %1510 = vadd.xlane.f32.xlu0 %v1509
    %v1511 = vpop.xlane.xlu0 %1510
    %v1512 = vsel %vm392, %v1482, 0.0
    %1513 = vadd.xlane.f32.xlu0 %v1512
    %v1514 = vpop.xlane.xlu0 %1513
    %v1515 = vsel %vm392, %v1483, 0.0
    %1516 = vadd.xlane.f32.xlu0 %v1515
    %v1517 = vpop.xlane.xlu0 %1516
    %v1518 = vsel %vm392, %v1484, 0.0
    %1519 = vadd.xlane.f32.xlu0 %v1518
    %v1520 = vpop.xlane.xlu0 %1519
    %v1521 = vsel %vm392, %v1485, 0.0
    %1522 = vadd.xlane.f32.xlu0 %v1521
    %v1523 = vpop.xlane.xlu0 %1522
    %v1524 = vsel %vm392, %v1486, 0.0
    %1525 = vadd.xlane.f32.xlu0 %v1524
    %v1526 = vpop.xlane.xlu0 %1525
    %v1527 = vsel %vm392, %v1487, 0.0
    %1528 = vadd.xlane.f32.xlu0 %v1527
    %v1529 = vpop.xlane.xlu0 %1528
    %v1530 = vsel %vm392, %v1488, 0.0
    %1531 = vadd.xlane.f32.xlu0 %v1530
    %v1532 = vpop.xlane.xlu0 %1531
    %v1533 = vsel %vm392, %v1489, 0.0
    %1534 = vadd.xlane.f32.xlu0 %v1533
    %v1535 = vpop.xlane.xlu0 %1534
    %v1536 = vsel %vm392, %v1490, 0.0
    %1537 = vadd.xlane.f32.xlu0 %v1536
    %v1538 = vpop.xlane.xlu0 %1537
    %v1539 = vmul.f32 %v1493, %v1442
    %v1540 = vmul.f32 %v1496, %v1442
    %v1541 = vmul.f32 %v1499, %v1442
    %v1542 = vmul.f32 %v1502, %v1442
    %v1543 = vmul.f32 %v1505, %v1442
    %v1544 = vmul.f32 %v1508, %v1442
    %v1545 = vmul.f32 %v1511, %v1442
    %v1546 = vmul.f32 %v1514, %v1442
    %v1547 = vmul.f32 %v1517, %v1442
    %v1548 = vmul.f32 %v1520, %v1442
    %v1549 = vmul.f32 %v1523, %v1442
    %v1550 = vmul.f32 %v1526, %v1442
    %v1551 = vmul.f32 %v1529, %v1442
    %v1552 = vmul.f32 %v1532, %v1442
    %v1553 = vmul.f32 %v1535, %v1442
    %v1554 = vmul.f32 %v1538, %v1442
    %v1555 = vadd.f32 %v1539, 1e-05
    %v1556 = vadd.f32 %v1540, 1e-05
    %v1557 = vadd.f32 %v1541, 1e-05
    %v1558 = vadd.f32 %v1542, 1e-05
    %v1559 = vadd.f32 %v1543, 1e-05
    %v1560 = vadd.f32 %v1544, 1e-05
    %v1561 = vadd.f32 %v1545, 1e-05
    %v1562 = vadd.f32 %v1546, 1e-05
    %v1563 = vadd.f32 %v1547, 1e-05
    %v1564 = vadd.f32 %v1548, 1e-05
    %v1565 = vadd.f32 %v1549, 1e-05
    %v1566 = vadd.f32 %v1550, 1e-05
    %v1567 = vadd.f32 %v1551, 1e-05
    %v1568 = vadd.f32 %v1552, 1e-05
    %v1569 = vadd.f32 %v1553, 1e-05
    %v1570 = vadd.f32 %v1554, 1e-05
    %v1571 = vrsqrt.pop %v1555
    %v1572 = vrsqrt.pop %v1556
    %v1573 = vrsqrt.pop %v1557
    %v1574 = vrsqrt.pop %v1558
    %v1575 = vrsqrt.pop %v1559
    %v1576 = vrsqrt.pop %v1560
    %v1577 = vrsqrt.pop %v1561
    %v1578 = vrsqrt.pop %v1562
    %v1579 = vrsqrt.pop %v1563
    %v1580 = vrsqrt.pop %v1564
    %v1581 = vrsqrt.pop %v1565
    %v1582 = vrsqrt.pop %v1566
    %v1583 = vrsqrt.pop %v1567
    %v1584 = vrsqrt.pop %v1568
    %v1585 = vrsqrt.pop %v1569
    %v1586 = vrsqrt.pop %v1570
    %v1587 = vmul.f32 %v1459, %v1571
    %v1588 = vmul.f32 %v1460, %v1572
    %v1589 = vmul.f32 %v1461, %v1573
    %v1590 = vmul.f32 %v1462, %v1574
    %v1591 = vmul.f32 %v1463, %v1575
    %v1592 = vmul.f32 %v1464, %v1576
    %v1593 = vmul.f32 %v1465, %v1577
    %v1594 = vmul.f32 %v1466, %v1578
    %v1595 = vmul.f32 %v1467, %v1579
    %v1596 = vmul.f32 %v1468, %v1580
    %v1597 = vmul.f32 %v1469, %v1581
    %v1598 = vmul.f32 %v1470, %v1582
    %v1599 = vmul.f32 %v1471, %v1583
    %v1600 = vmul.f32 %v1472, %v1584
    %v1601 = vmul.f32 %v1473, %v1585
    %v1602 = vmul.f32 %v1474, %v1586
    %v1603 = vlaneseq
    %v1604 = vshrl.u32 %v1603, 7
    %v1605 = vsub.s32 0, %v1604
    %v1606 = vrot.slane %v175, %v1605
    %v1607 = vmul.f32 %v1587, %v1606
    %v1608 = vmul.f32 %v1588, %v1606
    %v1609 = vmul.f32 %v1589, %v1606
    %v1610 = vmul.f32 %v1590, %v1606
    %v1611 = vmul.f32 %v1591, %v1606
    %v1612 = vmul.f32 %v1592, %v1606
    %v1613 = vmul.f32 %v1593, %v1606
    %v1614 = vmul.f32 %v1594, %v1606
    %v1615 = vmul.f32 %v1595, %v1606
    %v1616 = vmul.f32 %v1596, %v1606
    %v1617 = vmul.f32 %v1597, %v1606
    %v1618 = vmul.f32 %v1598, %v1606
    %v1619 = vmul.f32 %v1599, %v1606
    %v1620 = vmul.f32 %v1600, %v1606
    %v1621 = vmul.f32 %v1601, %v1606
    %v1622 = vmul.f32 %v1602, %v1606
    %v1623 = vlaneseq
    %v1624 = vshrl.u32 %v1623, 7
    %v1625 = vsub.s32 0, %v1624
    %v1626 = vrot.slane %v176, %v1625
    %v1627 = vadd.f32 %v1607, %v1626
    %v1628 = vadd.f32 %v1608, %v1626
    %v1629 = vadd.f32 %v1609, %v1626
    %v1630 = vadd.f32 %v1610, %v1626
    %v1631 = vadd.f32 %v1611, %v1626
    %v1632 = vadd.f32 %v1612, %v1626
    %v1633 = vadd.f32 %v1613, %v1626
    %v1634 = vadd.f32 %v1614, %v1626
    %v1635 = vadd.f32 %v1615, %v1626
    %v1636 = vadd.f32 %v1616, %v1626
    %v1637 = vadd.f32 %v1617, %v1626
    %v1638 = vadd.f32 %v1618, %v1626
    %v1639 = vadd.f32 %v1619, %v1626
    %v1640 = vadd.f32 %v1620, %v1626
    %v1641 = vadd.f32 %v1621, %v1626
    %v1642 = vadd.f32 %v1622, %v1626
    %v1643 = vlaneseq
    %v1644 = vshrl.u32 %v1643, 7
    %v1645 = vsub.s32 0, %v1644
    %v1646 = vrot.slane %v177, %v1645
    %v1648 = vsel %vm392, %v1627, 0
    %v1651 = vsel %vm392, %v1628, 0
    %v1654 = vsel %vm392, %v1629, 0
    %v1657 = vsel %vm392, %v1630, 0
    %v1660 = vsel %vm392, %v1631, 0
    %v1663 = vsel %vm392, %v1632, 0
    %v1666 = vsel %vm392, %v1633, 0
    %v1669 = vsel %vm392, %v1634, 0
    %v1672 = vsel %vm392, %v1635, 0
    %v1675 = vsel %vm392, %v1636, 0
    %v1678 = vsel %vm392, %v1637, 0
    %v1681 = vsel %vm392, %v1638, 0
    %v1684 = vsel %vm392, %v1639, 0
    %v1687 = vsel %vm392, %v1640, 0
    %v1690 = vsel %vm392, %v1641, 0
    %v1693 = vsel %vm392, %v1642, 0
    %1695 = vmatprep.subr.mxu0 0.0
    %1696 = vmatpush1.msra.mxu0 0.0
    %1697 = vmatprep.subr.mxu0 0.0
    %1698 = vmatpush1.msra.mxu0 0.0
    %1699 = vmatprep.subr.mxu0 0.0
    %1700 = vmatpush1.msra.mxu0 0.0
    %1701 = vmatprep.subr.mxu0 0.0
    %1702 = vmatpush1.msra.mxu0 0.0
    %1703 = vmatprep.subr.mxu0 0.0
    %1704 = vmatpush1.msra.mxu0 0.0
    %1705 = vmatprep.subr.mxu0 0.0
    %1706 = vmatpush1.msra.mxu0 0.0
    %1707 = vmatprep.subr.mxu0 0.0
    %1708 = vmatpush1.msra.mxu0 0.0
    %1709 = vmatprep.subr.mxu0 0.0
    %1710 = vmatpush1.msra.mxu0 0.0
    %1711 = vmatprep.subr.mxu0 0.0
    %1712 = vmatpush1.msra.mxu0 0.0
    %1713 = vmatprep.subr.mxu0 0.0
    %1714 = vmatpush1.msra.mxu0 0.0
    %1715 = vmatprep.subr.mxu0 0.0
    %1716 = vmatpush1.msra.mxu0 0.0
    %1717 = vmatprep.subr.mxu0 0.0
    %1718 = vmatpush1.msra.mxu0 0.0
    %1719 = vmatprep.subr.mxu0 0.0
    %1720 = vmatpush1.msra.mxu0 %v123
    %1721 = vmatprep.subr.mxu0 0.0
    %1722 = vmatpush1.msra.mxu0 %v122
    %1723 = vmatprep.subr.mxu0 0.0
    %1724 = vmatpush1.msra.mxu0 %v121
    %1725 = vmatprep.subr.mxu0 0.0
    %1726 = vmatpush1.msra.mxu0 %v120
    %1727 = vmatprep.subr.mxu0 0.0
    %1728 = vmatpush2.msra.mxu0 0.0
    %1729 = vmatprep.subr.mxu0 0.0
    %1730 = vmatpush2.msra.mxu0 0.0
    %1731 = vmatprep.subr.mxu0 0.0
    %1732 = vmatpush2.msra.mxu0 0.0
    %1733 = vmatprep.subr.mxu0 0.0
    %1734 = vmatpush2.msra.mxu0 0.0
    %1735 = vmatprep.subr.mxu0 0.0
    %1736 = vmatpush2.msra.mxu0 0.0
    %1737 = vmatprep.subr.mxu0 0.0
    %1738 = vmatpush2.msra.mxu0 0.0
    %1739 = vmatprep.subr.mxu0 0.0
    %1740 = vmatpush2.msra.mxu0 0.0
    %1741 = vmatprep.subr.mxu0 0.0
    %1742 = vmatpush2.msra.mxu0 0.0
    %1743 = vmatprep.subr.mxu0 0.0
    %1744 = vmatpush2.msra.mxu0 0.0
    %1745 = vmatprep.subr.mxu0 0.0
    %1746 = vmatpush2.msra.mxu0 0.0
    %1747 = vmatprep.subr.mxu0 0.0
    %1748 = vmatpush2.msra.mxu0 0.0
    %1749 = vmatprep.subr.mxu0 0.0
    %1750 = vmatpush2.msra.mxu0 0.0
    %1751 = vmatprep.subr.mxu0 0.0
    %1752 = vmatpush2.msra.mxu0 0.0
    %1753 = vmatprep.subr.mxu0 0.0
    %1754 = vmatpush2.msra.mxu0 0.0
    %1755 = vmatprep.subr.mxu0 0.0
    %1756 = vmatpush2.msra.mxu0 0.0
    %1757 = vmatprep.subr.mxu0 0.0
    %1758 = vmatpush2.msra.mxu0 0.0
    %1759 = vmatprep.mubr.f32.mxu0 0.0
    %1760 = vmatmul.mubr.f32.gmra.mxu0 %v1648
    %v1761 = vpop.f32.mrf.mxu0
    %v1762 = vadd.f32 %v1646, %v1761
    %v1763 = vpop.f32.mrf.mxu0
    %1764 = vmatprep.mubr.f32.mxu0 0.0
    %1765 = vmatmul.mubr.f32.gmra.mxu0 %v1651
    %v1766 = vpop.f32.mrf.mxu0
    %v1767 = vadd.f32 %v1646, %v1766
    %v1768 = vpop.f32.mrf.mxu0
    %1769 = vmatprep.mubr.f32.mxu0 0.0
    %1770 = vmatmul.mubr.f32.gmra.mxu0 %v1654
    %v1771 = vpop.f32.mrf.mxu0
    %v1772 = vadd.f32 %v1646, %v1771
    %v1773 = vpop.f32.mrf.mxu0
    %1774 = vmatprep.mubr.f32.mxu0 0.0
    %1775 = vmatmul.mubr.f32.gmra.mxu0 %v1657
    %v1776 = vpop.f32.mrf.mxu0
    %v1777 = vadd.f32 %v1646, %v1776
    %v1778 = vpop.f32.mrf.mxu0
    %1779 = vmatprep.mubr.f32.mxu0 0.0
    %1780 = vmatmul.mubr.f32.gmra.mxu0 %v1660
    %v1781 = vpop.f32.mrf.mxu0
    %v1782 = vadd.f32 %v1646, %v1781
    %v1783 = vpop.f32.mrf.mxu0
    %1784 = vmatprep.mubr.f32.mxu0 0.0
    %1785 = vmatmul.mubr.f32.gmra.mxu0 %v1663
    %v1786 = vpop.f32.mrf.mxu0
    %v1787 = vadd.f32 %v1646, %v1786
    %v1788 = vpop.f32.mrf.mxu0
    %1789 = vmatprep.mubr.f32.mxu0 0.0
    %1790 = vmatmul.mubr.f32.gmra.mxu0 %v1666
    %v1791 = vpop.f32.mrf.mxu0
    %v1792 = vadd.f32 %v1646, %v1791
    %v1793 = vpop.f32.mrf.mxu0
    %1794 = vmatprep.mubr.f32.mxu0 0.0
    %1795 = vmatmul.mubr.f32.gmra.mxu0 %v1669
    %v1796 = vpop.f32.mrf.mxu0
    %v1797 = vadd.f32 %v1646, %v1796
    %v1798 = vpop.f32.mrf.mxu0
    %1799 = vmatprep.mubr.f32.mxu0 0.0
    %1800 = vmatmul.mubr.f32.gmra.mxu0 %v1672
    %v1801 = vpop.f32.mrf.mxu0
    %v1802 = vadd.f32 %v1646, %v1801
    %v1803 = vpop.f32.mrf.mxu0
    %1804 = vmatprep.mubr.f32.mxu0 0.0
    %1805 = vmatmul.mubr.f32.gmra.mxu0 %v1675
    %v1806 = vpop.f32.mrf.mxu0
    %v1807 = vadd.f32 %v1646, %v1806
    %v1808 = vpop.f32.mrf.mxu0
    %1809 = vmatprep.mubr.f32.mxu0 0.0
    %1810 = vmatmul.mubr.f32.gmra.mxu0 %v1678
    %v1811 = vpop.f32.mrf.mxu0
    %v1812 = vadd.f32 %v1646, %v1811
    %v1813 = vpop.f32.mrf.mxu0
    %1814 = vmatprep.mubr.f32.mxu0 0.0
    %1815 = vmatmul.mubr.f32.gmra.mxu0 %v1681
    %v1816 = vpop.f32.mrf.mxu0
    %v1817 = vadd.f32 %v1646, %v1816
    %v1818 = vpop.f32.mrf.mxu0
    %1819 = vmatprep.mubr.f32.mxu0 0.0
    %1820 = vmatmul.mubr.f32.gmra.mxu0 %v1684
    %v1821 = vpop.f32.mrf.mxu0
    %v1822 = vadd.f32 %v1646, %v1821
    %v1823 = vpop.f32.mrf.mxu0
    %1824 = vmatprep.mubr.f32.mxu0 0.0
    %1825 = vmatmul.mubr.f32.gmra.mxu0 %v1687
    %v1826 = vpop.f32.mrf.mxu0
    %v1827 = vadd.f32 %v1646, %v1826
    %v1828 = vpop.f32.mrf.mxu0
    %1829 = vmatprep.mubr.f32.mxu0 0.0
    %1830 = vmatmul.mubr.f32.gmra.mxu0 %v1690
    %v1831 = vpop.f32.mrf.mxu0
    %v1832 = vadd.f32 %v1646, %v1831
    %v1833 = vpop.f32.mrf.mxu0
    %1834 = vmatprep.mubr.f32.mxu0 0.0
    %1835 = vmatmul.mubr.f32.gmra.mxu0 %v1693
    %v1836 = vpop.f32.mrf.mxu0
    %v1837 = vadd.f32 %v1646, %v1836
    %v1838 = vpop.f32.mrf.mxu0
    %1839 = vdwg.mxu0
    %v1840 = vmax.f32 %v1762, 0.0
    %v1841 = vmax.f32 %v1767, 0.0
    %v1842 = vmax.f32 %v1772, 0.0
    %v1843 = vmax.f32 %v1777, 0.0
    %v1844 = vmax.f32 %v1782, 0.0
    %v1845 = vmax.f32 %v1787, 0.0
    %v1846 = vmax.f32 %v1792, 0.0
    %v1847 = vmax.f32 %v1797, 0.0
    %v1848 = vmax.f32 %v1802, 0.0
    %v1849 = vmax.f32 %v1807, 0.0
    %v1850 = vmax.f32 %v1812, 0.0
    %v1851 = vmax.f32 %v1817, 0.0
    %v1852 = vmax.f32 %v1822, 0.0
    %v1853 = vmax.f32 %v1827, 0.0
    %v1854 = vmax.f32 %v1832, 0.0
    %v1855 = vmax.f32 %v1837, 0.0
    %v1856 = vlaneseq
    %v1857 = vshrl.u32 %v1856, 7
    %v1858 = vsub.s32 0, %v1857
    %v1859 = vrot.slane %v178, %v1858
    %vm1860 = vcmask 523264
    %v1862 = vsel %vm1860, %v1840, 0
    %v1865 = vsel %vm1860, %v1841, 0
    %v1868 = vsel %vm1860, %v1842, 0
    %v1871 = vsel %vm1860, %v1843, 0
    %v1874 = vsel %vm1860, %v1844, 0
    %v1877 = vsel %vm1860, %v1845, 0
    %v1880 = vsel %vm1860, %v1846, 0
    %v1883 = vsel %vm1860, %v1847, 0
    %v1886 = vsel %vm1860, %v1848, 0
    %v1889 = vsel %vm1860, %v1849, 0
    %v1892 = vsel %vm1860, %v1850, 0
    %v1895 = vsel %vm1860, %v1851, 0
    %v1898 = vsel %vm1860, %v1852, 0
    %v1901 = vsel %vm1860, %v1853, 0
    %v1904 = vsel %vm1860, %v1854, 0
    %v1907 = vsel %vm1860, %v1855, 0
    %1909 = vmatprep.subr.mxu0 0.0
    %1910 = vmatpush1.msra.mxu0 0.0
    %1911 = vmatprep.subr.mxu0 0.0
    %1912 = vmatpush1.msra.mxu0 0.0
    %1913 = vmatprep.subr.mxu0 0.0
    %1914 = vmatpush1.msra.mxu0 0.0
    %1915 = vmatprep.subr.mxu0 0.0
    %1916 = vmatpush1.msra.mxu0 0.0
    %1917 = vmatprep.subr.mxu0 0.0
    %1918 = vmatpush1.msra.mxu0 0.0
    %1919 = vmatprep.subr.mxu0 0.0
    %1920 = vmatpush1.msra.mxu0 0.0
    %1921 = vmatprep.subr.mxu0 0.0
    %1922 = vmatpush1.msra.mxu0 0.0
    %1923 = vmatprep.subr.mxu0 0.0
    %1924 = vmatpush1.msra.mxu0 0.0
    %1925 = vmatprep.subr.mxu0 0.0
    %1926 = vmatpush1.msra.mxu0 %v139
    %1927 = vmatprep.subr.mxu0 0.0
    %1928 = vmatpush1.msra.mxu0 %v138
    %1929 = vmatprep.subr.mxu0 0.0
    %1930 = vmatpush1.msra.mxu0 %v137
    %1931 = vmatprep.subr.mxu0 0.0
    %1932 = vmatpush1.msra.mxu0 %v136
    %1933 = vmatprep.subr.mxu0 0.0
    %1934 = vmatpush1.msra.mxu0 %v135
    %1935 = vmatprep.subr.mxu0 0.0
    %1936 = vmatpush1.msra.mxu0 %v134
    %1937 = vmatprep.subr.mxu0 0.0
    %1938 = vmatpush1.msra.mxu0 %v133
    %1939 = vmatprep.subr.mxu0 0.0
    %1940 = vmatpush1.msra.mxu0 %v132
    %1941 = vmatprep.subr.mxu0 0.0
    %1942 = vmatpush2.msra.mxu0 0.0
    %1943 = vmatprep.subr.mxu0 0.0
    %1944 = vmatpush2.msra.mxu0 0.0
    %1945 = vmatprep.subr.mxu0 0.0
    %1946 = vmatpush2.msra.mxu0 0.0
    %1947 = vmatprep.subr.mxu0 0.0
    %1948 = vmatpush2.msra.mxu0 0.0
    %1949 = vmatprep.subr.mxu0 0.0
    %1950 = vmatpush2.msra.mxu0 0.0
    %1951 = vmatprep.subr.mxu0 0.0
    %1952 = vmatpush2.msra.mxu0 0.0
    %1953 = vmatprep.subr.mxu0 0.0
    %1954 = vmatpush2.msra.mxu0 0.0
    %1955 = vmatprep.subr.mxu0 0.0
    %1956 = vmatpush2.msra.mxu0 0.0
    %1957 = vmatprep.subr.mxu0 0.0
    %1958 = vmatpush2.msra.mxu0 0.0
    %1959 = vmatprep.subr.mxu0 0.0
    %1960 = vmatpush2.msra.mxu0 0.0
    %1961 = vmatprep.subr.mxu0 0.0
    %1962 = vmatpush2.msra.mxu0 0.0
    %1963 = vmatprep.subr.mxu0 0.0
    %1964 = vmatpush2.msra.mxu0 0.0
    %1965 = vmatprep.subr.mxu0 0.0
    %1966 = vmatpush2.msra.mxu0 0.0
    %1967 = vmatprep.subr.mxu0 0.0
    %1968 = vmatpush2.msra.mxu0 0.0
    %1969 = vmatprep.subr.mxu0 0.0
    %1970 = vmatpush2.msra.mxu0 0.0
    %1971 = vmatprep.subr.mxu0 0.0
    %1972 = vmatpush2.msra.mxu0 0.0
    %1973 = vmatprep.mubr.f32.mxu0 0.0
    %1974 = vmatmul.mubr.f32.gmra.mxu0 %v1862
    %v1975 = vpop.f32.mrf.mxu0
    %v1976 = vadd.f32 %v1859, %v1975
    %v1977 = vpop.f32.mrf.mxu0
    %1978 = vmatprep.mubr.f32.mxu0 0.0
    %1979 = vmatmul.mubr.f32.gmra.mxu0 %v1865
    %v1980 = vpop.f32.mrf.mxu0
    %v1981 = vadd.f32 %v1859, %v1980
    %v1982 = vpop.f32.mrf.mxu0
    %1983 = vmatprep.mubr.f32.mxu0 0.0
    %1984 = vmatmul.mubr.f32.gmra.mxu0 %v1868
    %v1985 = vpop.f32.mrf.mxu0
    %v1986 = vadd.f32 %v1859, %v1985
    %v1987 = vpop.f32.mrf.mxu0
    %1988 = vmatprep.mubr.f32.mxu0 0.0
    %1989 = vmatmul.mubr.f32.gmra.mxu0 %v1871
    %v1990 = vpop.f32.mrf.mxu0
    %v1991 = vadd.f32 %v1859, %v1990
    %v1992 = vpop.f32.mrf.mxu0
    %1993 = vmatprep.mubr.f32.mxu0 0.0
    %1994 = vmatmul.mubr.f32.gmra.mxu0 %v1874
    %v1995 = vpop.f32.mrf.mxu0
    %v1996 = vadd.f32 %v1859, %v1995
    %v1997 = vpop.f32.mrf.mxu0
    %1998 = vmatprep.mubr.f32.mxu0 0.0
    %1999 = vmatmul.mubr.f32.gmra.mxu0 %v1877
    %v2000 = vpop.f32.mrf.mxu0
    %v2001 = vadd.f32 %v1859, %v2000
    %v2002 = vpop.f32.mrf.mxu0
    %2003 = vmatprep.mubr.f32.mxu0 0.0
    %2004 = vmatmul.mubr.f32.gmra.mxu0 %v1880
    %v2005 = vpop.f32.mrf.mxu0
    %v2006 = vadd.f32 %v1859, %v2005
    %v2007 = vpop.f32.mrf.mxu0
    %2008 = vmatprep.mubr.f32.mxu0 0.0
    %2009 = vmatmul.mubr.f32.gmra.mxu0 %v1883
    %v2010 = vpop.f32.mrf.mxu0
    %v2011 = vadd.f32 %v1859, %v2010
    %v2012 = vpop.f32.mrf.mxu0
    %2013 = vmatprep.mubr.f32.mxu0 0.0
    %2014 = vmatmul.mubr.f32.gmra.mxu0 %v1886
    %v2015 = vpop.f32.mrf.mxu0
    %v2016 = vadd.f32 %v1859, %v2015
    %v2017 = vpop.f32.mrf.mxu0
    %2018 = vmatprep.mubr.f32.mxu0 0.0
    %2019 = vmatmul.mubr.f32.gmra.mxu0 %v1889
    %v2020 = vpop.f32.mrf.mxu0
    %v2021 = vadd.f32 %v1859, %v2020
    %v2022 = vpop.f32.mrf.mxu0
    %2023 = vmatprep.mubr.f32.mxu0 0.0
    %2024 = vmatmul.mubr.f32.gmra.mxu0 %v1892
    %v2025 = vpop.f32.mrf.mxu0
    %v2026 = vadd.f32 %v1859, %v2025
    %v2027 = vpop.f32.mrf.mxu0
    %2028 = vmatprep.mubr.f32.mxu0 0.0
    %2029 = vmatmul.mubr.f32.gmra.mxu0 %v1895
    %v2030 = vpop.f32.mrf.mxu0
    %v2031 = vadd.f32 %v1859, %v2030
    %v2032 = vpop.f32.mrf.mxu0
    %2033 = vmatprep.mubr.f32.mxu0 0.0
    %2034 = vmatmul.mubr.f32.gmra.mxu0 %v1898
    %v2035 = vpop.f32.mrf.mxu0
    %v2036 = vadd.f32 %v1859, %v2035
    %v2037 = vpop.f32.mrf.mxu0
    %2038 = vmatprep.mubr.f32.mxu0 0.0
    %2039 = vmatmul.mubr.f32.gmra.mxu0 %v1901
    %v2040 = vpop.f32.mrf.mxu0
    %v2041 = vadd.f32 %v1859, %v2040
    %v2042 = vpop.f32.mrf.mxu0
    %2043 = vmatprep.mubr.f32.mxu0 0.0
    %2044 = vmatmul.mubr.f32.gmra.mxu0 %v1904
    %v2045 = vpop.f32.mrf.mxu0
    %v2046 = vadd.f32 %v1859, %v2045
    %v2047 = vpop.f32.mrf.mxu0
    %2048 = vmatprep.mubr.f32.mxu0 0.0
    %2049 = vmatmul.mubr.f32.gmra.mxu0 %v1907
    %v2050 = vpop.f32.mrf.mxu0
    %v2051 = vadd.f32 %v1859, %v2050
    %v2052 = vpop.f32.mrf.mxu0
    %2053 = vdwg.mxu0
    %v2054 = vadd.f32 %v1627, %v1976
    %v2055 = vadd.f32 %v1628, %v1981
    %v2056 = vadd.f32 %v1629, %v1986
    %v2057 = vadd.f32 %v1630, %v1991
    %v2058 = vadd.f32 %v1631, %v1996
    %v2059 = vadd.f32 %v1632, %v2001
    %v2060 = vadd.f32 %v1633, %v2006
    %v2061 = vadd.f32 %v1634, %v2011
    %v2062 = vadd.f32 %v1635, %v2016
    %v2063 = vadd.f32 %v1636, %v2021
    %v2064 = vadd.f32 %v1637, %v2026
    %v2065 = vadd.f32 %v1638, %v2031
    %v2066 = vadd.f32 %v1639, %v2036
    %v2067 = vadd.f32 %v1640, %v2041
    %v2068 = vadd.f32 %v1641, %v2046
    %v2069 = vadd.f32 %v1642, %v2051
    %v2070 = vsel %vm392, %v2054, 0.0
    %2071 = vadd.xlane.f32.xlu0 %v2070
    %v2072 = vpop.xlane.xlu0 %2071
    %v2073 = vsel %vm392, %v2055, 0.0
    %2074 = vadd.xlane.f32.xlu0 %v2073
    %v2075 = vpop.xlane.xlu0 %2074
    %v2076 = vsel %vm392, %v2056, 0.0
    %2077 = vadd.xlane.f32.xlu0 %v2076
    %v2078 = vpop.xlane.xlu0 %2077
    %v2079 = vsel %vm392, %v2057, 0.0
    %2080 = vadd.xlane.f32.xlu0 %v2079
    %v2081 = vpop.xlane.xlu0 %2080
    %v2082 = vsel %vm392, %v2058, 0.0
    %2083 = vadd.xlane.f32.xlu0 %v2082
    %v2084 = vpop.xlane.xlu0 %2083
    %v2085 = vsel %vm392, %v2059, 0.0
    %2086 = vadd.xlane.f32.xlu0 %v2085
    %v2087 = vpop.xlane.xlu0 %2086
    %v2088 = vsel %vm392, %v2060, 0.0
    %2089 = vadd.xlane.f32.xlu0 %v2088
    %v2090 = vpop.xlane.xlu0 %2089
    %v2091 = vsel %vm392, %v2061, 0.0
    %2092 = vadd.xlane.f32.xlu0 %v2091
    %v2093 = vpop.xlane.xlu0 %2092
    %v2094 = vsel %vm392, %v2062, 0.0
    %2095 = vadd.xlane.f32.xlu0 %v2094
    %v2096 = vpop.xlane.xlu0 %2095
    %v2097 = vsel %vm392, %v2063, 0.0
    %2098 = vadd.xlane.f32.xlu0 %v2097
    %v2099 = vpop.xlane.xlu0 %2098
    %v2100 = vsel %vm392, %v2064, 0.0
    %2101 = vadd.xlane.f32.xlu0 %v2100
    %v2102 = vpop.xlane.xlu0 %2101
    %v2103 = vsel %vm392, %v2065, 0.0
    %2104 = vadd.xlane.f32.xlu0 %v2103
    %v2105 = vpop.xlane.xlu0 %2104
    %v2106 = vsel %vm392, %v2066, 0.0
    %2107 = vadd.xlane.f32.xlu0 %v2106
    %v2108 = vpop.xlane.xlu0 %2107
    %v2109 = vsel %vm392, %v2067, 0.0
    %2110 = vadd.xlane.f32.xlu0 %v2109
    %v2111 = vpop.xlane.xlu0 %2110
    %v2112 = vsel %vm392, %v2068, 0.0
    %2113 = vadd.xlane.f32.xlu0 %v2112
    %v2114 = vpop.xlane.xlu0 %2113
    %v2115 = vsel %vm392, %v2069, 0.0
    %2116 = vadd.xlane.f32.xlu0 %v2115
    %v2117 = vpop.xlane.xlu0 %2116
    %v2118 = vmul.f32 %v2072, %v1442
    %v2119 = vmul.f32 %v2075, %v1442
    %v2120 = vmul.f32 %v2078, %v1442
    %v2121 = vmul.f32 %v2081, %v1442
    %v2122 = vmul.f32 %v2084, %v1442
    %v2123 = vmul.f32 %v2087, %v1442
    %v2124 = vmul.f32 %v2090, %v1442
    %v2125 = vmul.f32 %v2093, %v1442
    %v2126 = vmul.f32 %v2096, %v1442
    %v2127 = vmul.f32 %v2099, %v1442
    %v2128 = vmul.f32 %v2102, %v1442
    %v2129 = vmul.f32 %v2105, %v1442
    %v2130 = vmul.f32 %v2108, %v1442
    %v2131 = vmul.f32 %v2111, %v1442
    %v2132 = vmul.f32 %v2114, %v1442
    %v2133 = vmul.f32 %v2117, %v1442
    %v2134 = vsub.f32 %v2054, %v2118
    %v2135 = vsub.f32 %v2055, %v2119
    %v2136 = vsub.f32 %v2056, %v2120
    %v2137 = vsub.f32 %v2057, %v2121
    %v2138 = vsub.f32 %v2058, %v2122
    %v2139 = vsub.f32 %v2059, %v2123
    %v2140 = vsub.f32 %v2060, %v2124
    %v2141 = vsub.f32 %v2061, %v2125
    %v2142 = vsub.f32 %v2062, %v2126
    %v2143 = vsub.f32 %v2063, %v2127
    %v2144 = vsub.f32 %v2064, %v2128
    %v2145 = vsub.f32 %v2065, %v2129
    %v2146 = vsub.f32 %v2066, %v2130
    %v2147 = vsub.f32 %v2067, %v2131
    %v2148 = vsub.f32 %v2068, %v2132
    %v2149 = vsub.f32 %v2069, %v2133
    %v2150 = vmul.f32 %v2134, %v2134
    %v2151 = vmul.f32 %v2135, %v2135
    %v2152 = vmul.f32 %v2136, %v2136
    %v2153 = vmul.f32 %v2137, %v2137
    %v2154 = vmul.f32 %v2138, %v2138
    %v2155 = vmul.f32 %v2139, %v2139
    %v2156 = vmul.f32 %v2140, %v2140
    %v2157 = vmul.f32 %v2141, %v2141
    %v2158 = vmul.f32 %v2142, %v2142
    %v2159 = vmul.f32 %v2143, %v2143
    %v2160 = vmul.f32 %v2144, %v2144
    %v2161 = vmul.f32 %v2145, %v2145
    %v2162 = vmul.f32 %v2146, %v2146
    %v2163 = vmul.f32 %v2147, %v2147
    %v2164 = vmul.f32 %v2148, %v2148
    %v2165 = vmul.f32 %v2149, %v2149
    %v2166 = vsel %vm392, %v2150, 0.0
    %2167 = vadd.xlane.f32.xlu0 %v2166
    %v2168 = vpop.xlane.xlu0 %2167
    %v2169 = vsel %vm392, %v2151, 0.0
    %2170 = vadd.xlane.f32.xlu0 %v2169
    %v2171 = vpop.xlane.xlu0 %2170
    %v2172 = vsel %vm392, %v2152, 0.0
    %2173 = vadd.xlane.f32.xlu0 %v2172
    %v2174 = vpop.xlane.xlu0 %2173
    %v2175 = vsel %vm392, %v2153, 0.0
    %2176 = vadd.xlane.f32.xlu0 %v2175
    %v2177 = vpop.xlane.xlu0 %2176
    %v2178 = vsel %vm392, %v2154, 0.0
    %2179 = vadd.xlane.f32.xlu0 %v2178
    %v2180 = vpop.xlane.xlu0 %2179
    %v2181 = vsel %vm392, %v2155, 0.0
    %2182 = vadd.xlane.f32.xlu0 %v2181
    %v2183 = vpop.xlane.xlu0 %2182
    %v2184 = vsel %vm392, %v2156, 0.0
    %2185 = vadd.xlane.f32.xlu0 %v2184
    %v2186 = vpop.xlane.xlu0 %2185
    %v2187 = vsel %vm392, %v2157, 0.0
    %2188 = vadd.xlane.f32.xlu0 %v2187
    %v2189 = vpop.xlane.xlu0 %2188
    %v2190 = vsel %vm392, %v2158, 0.0
    %2191 = vadd.xlane.f32.xlu0 %v2190
    %v2192 = vpop.xlane.xlu0 %2191
    %v2193 = vsel %vm392, %v2159, 0.0
    %2194 = vadd.xlane.f32.xlu0 %v2193
    %v2195 = vpop.xlane.xlu0 %2194
    %v2196 = vsel %vm392, %v2160, 0.0
    %2197 = vadd.xlane.f32.xlu0 %v2196
    %v2198 = vpop.xlane.xlu0 %2197
    %v2199 = vsel %vm392, %v2161, 0.0
    %2200 = vadd.xlane.f32.xlu0 %v2199
    %v2201 = vpop.xlane.xlu0 %2200
    %v2202 = vsel %vm392, %v2162, 0.0
    %2203 = vadd.xlane.f32.xlu0 %v2202
    %v2204 = vpop.xlane.xlu0 %2203
    %v2205 = vsel %vm392, %v2163, 0.0
    %2206 = vadd.xlane.f32.xlu0 %v2205
    %v2207 = vpop.xlane.xlu0 %2206
    %v2208 = vsel %vm392, %v2164, 0.0
    %2209 = vadd.xlane.f32.xlu0 %v2208
    %v2210 = vpop.xlane.xlu0 %2209
    %v2211 = vsel %vm392, %v2165, 0.0
    %2212 = vadd.xlane.f32.xlu0 %v2211
    %v2213 = vpop.xlane.xlu0 %2212
    %v2214 = vmul.f32 %v2168, %v1442
    %v2215 = vmul.f32 %v2171, %v1442
    %v2216 = vmul.f32 %v2174, %v1442
    %v2217 = vmul.f32 %v2177, %v1442
    %v2218 = vmul.f32 %v2180, %v1442
    %v2219 = vmul.f32 %v2183, %v1442
    %v2220 = vmul.f32 %v2186, %v1442
    %v2221 = vmul.f32 %v2189, %v1442
    %v2222 = vmul.f32 %v2192, %v1442
    %v2223 = vmul.f32 %v2195, %v1442
    %v2224 = vmul.f32 %v2198, %v1442
    %v2225 = vmul.f32 %v2201, %v1442
    %v2226 = vmul.f32 %v2204, %v1442
    %v2227 = vmul.f32 %v2207, %v1442
    %v2228 = vmul.f32 %v2210, %v1442
    %v2229 = vmul.f32 %v2213, %v1442
    %v2230 = vadd.f32 %v2214, 1e-05
    %v2231 = vadd.f32 %v2215, 1e-05
    %v2232 = vadd.f32 %v2216, 1e-05
    %v2233 = vadd.f32 %v2217, 1e-05
    %v2234 = vadd.f32 %v2218, 1e-05
    %v2235 = vadd.f32 %v2219, 1e-05
    %v2236 = vadd.f32 %v2220, 1e-05
    %v2237 = vadd.f32 %v2221, 1e-05
    %v2238 = vadd.f32 %v2222, 1e-05
    %v2239 = vadd.f32 %v2223, 1e-05
    %v2240 = vadd.f32 %v2224, 1e-05
    %v2241 = vadd.f32 %v2225, 1e-05
    %v2242 = vadd.f32 %v2226, 1e-05
    %v2243 = vadd.f32 %v2227, 1e-05
    %v2244 = vadd.f32 %v2228, 1e-05
    %v2245 = vadd.f32 %v2229, 1e-05
    %v2246 = vrsqrt.pop %v2230
    %v2247 = vrsqrt.pop %v2231
    %v2248 = vrsqrt.pop %v2232
    %v2249 = vrsqrt.pop %v2233
    %v2250 = vrsqrt.pop %v2234
    %v2251 = vrsqrt.pop %v2235
    %v2252 = vrsqrt.pop %v2236
    %v2253 = vrsqrt.pop %v2237
    %v2254 = vrsqrt.pop %v2238
    %v2255 = vrsqrt.pop %v2239
    %v2256 = vrsqrt.pop %v2240
    %v2257 = vrsqrt.pop %v2241
    %v2258 = vrsqrt.pop %v2242
    %v2259 = vrsqrt.pop %v2243
    %v2260 = vrsqrt.pop %v2244
    %v2261 = vrsqrt.pop %v2245
    %v2262 = vmul.f32 %v2134, %v2246
    %v2263 = vmul.f32 %v2135, %v2247
    %v2264 = vmul.f32 %v2136, %v2248
    %v2265 = vmul.f32 %v2137, %v2249
    %v2266 = vmul.f32 %v2138, %v2250
    %v2267 = vmul.f32 %v2139, %v2251
    %v2268 = vmul.f32 %v2140, %v2252
    %v2269 = vmul.f32 %v2141, %v2253
    %v2270 = vmul.f32 %v2142, %v2254
    %v2271 = vmul.f32 %v2143, %v2255
    %v2272 = vmul.f32 %v2144, %v2256
    %v2273 = vmul.f32 %v2145, %v2257
    %v2274 = vmul.f32 %v2146, %v2258
    %v2275 = vmul.f32 %v2147, %v2259
    %v2276 = vmul.f32 %v2148, %v2260
    %v2277 = vmul.f32 %v2149, %v2261
    %v2278 = vlaneseq
    %v2279 = vshrl.u32 %v2278, 7
    %v2280 = vsub.s32 0, %v2279
    %v2281 = vrot.slane %v179, %v2280
    %v2282 = vmul.f32 %v2262, %v2281
    %v2283 = vmul.f32 %v2263, %v2281
    %v2284 = vmul.f32 %v2264, %v2281
    %v2285 = vmul.f32 %v2265, %v2281
    %v2286 = vmul.f32 %v2266, %v2281
    %v2287 = vmul.f32 %v2267, %v2281
    %v2288 = vmul.f32 %v2268, %v2281
    %v2289 = vmul.f32 %v2269, %v2281
    %v2290 = vmul.f32 %v2270, %v2281
    %v2291 = vmul.f32 %v2271, %v2281
    %v2292 = vmul.f32 %v2272, %v2281
    %v2293 = vmul.f32 %v2273, %v2281
    %v2294 = vmul.f32 %v2274, %v2281
    %v2295 = vmul.f32 %v2275, %v2281
    %v2296 = vmul.f32 %v2276, %v2281
    %v2297 = vmul.f32 %v2277, %v2281
    %v2298 = vlaneseq
    %v2299 = vshrl.u32 %v2298, 7
    %v2300 = vsub.s32 0, %v2299
    %v2301 = vrot.slane %v180, %v2300
    %v2302 = vadd.f32 %v2282, %v2301
    %v2303 = vadd.f32 %v2283, %v2301
    %v2304 = vadd.f32 %v2284, %v2301
    %v2305 = vadd.f32 %v2285, %v2301
    %v2306 = vadd.f32 %v2286, %v2301
    %v2307 = vadd.f32 %v2287, %v2301
    %v2308 = vadd.f32 %v2288, %v2301
    %v2309 = vadd.f32 %v2289, %v2301
    %v2310 = vadd.f32 %v2290, %v2301
    %v2311 = vadd.f32 %v2291, %v2301
    %v2312 = vadd.f32 %v2292, %v2301
    %v2313 = vadd.f32 %v2293, %v2301
    %v2314 = vadd.f32 %v2294, %v2301
    %v2315 = vadd.f32 %v2295, %v2301
    %v2316 = vadd.f32 %v2296, %v2301
    %v2317 = vadd.f32 %v2297, %v2301
    %v2318 = vld [vmem:[%s5] sm:$0xff]
    %v2319 = vld [vmem:[%s5 + $0x8] sm:$0xff]
    %2320 = vmatprep.subr.mxu0 0.0
    %2321 = vmatpush1.msra.mxu0 %v2317
    %2322 = vmatprep.subr.mxu0 0.0
    %2323 = vmatpush1.msra.mxu0 %v2316
    %2324 = vmatprep.subr.mxu0 0.0
    %2325 = vmatpush1.msra.mxu0 %v2315
    %2326 = vmatprep.subr.mxu0 0.0
    %2327 = vmatpush1.msra.mxu0 %v2314
    %2328 = vmatprep.subr.mxu0 0.0
    %2329 = vmatpush1.msra.mxu0 %v2313
    %2330 = vmatprep.subr.mxu0 0.0
    %2331 = vmatpush1.msra.mxu0 %v2312
    %2332 = vmatprep.subr.mxu0 0.0
    %2333 = vmatpush1.msra.mxu0 %v2311
    %2334 = vmatprep.subr.mxu0 0.0
    %2335 = vmatpush1.msra.mxu0 %v2310
    %2336 = vmatprep.subr.mxu0 0.0
    %2337 = vmatpush1.msra.mxu0 %v2309
    %2338 = vmatprep.subr.mxu0 0.0
    %2339 = vmatpush1.msra.mxu0 %v2308
    %2340 = vmatprep.subr.mxu0 0.0
    %2341 = vmatpush1.msra.mxu0 %v2307
    %2342 = vmatprep.subr.mxu0 0.0
    %2343 = vmatpush1.msra.mxu0 %v2306
    %2344 = vmatprep.subr.mxu0 0.0
    %2345 = vmatpush1.msra.mxu0 %v2305
    %2346 = vmatprep.subr.mxu0 0.0
    %2347 = vmatpush1.msra.mxu0 %v2304
    %2348 = vmatprep.subr.mxu0 0.0
    %2349 = vmatpush1.msra.mxu0 %v2303
    %2350 = vmatprep.subr.mxu0 0.0
    %2351 = vmatpush1.msra.mxu0 %v2302
    %2352 = vmatprep.subr.mxu0 0.0
    %2353 = vmatpush2.msra.mxu0 0.0
    %2354 = vmatprep.subr.mxu0 0.0
    %2355 = vmatpush2.msra.mxu0 0.0
    %2356 = vmatprep.subr.mxu0 0.0
    %2357 = vmatpush2.msra.mxu0 0.0
    %2358 = vmatprep.subr.mxu0 0.0
    %2359 = vmatpush2.msra.mxu0 0.0
    %2360 = vmatprep.subr.mxu0 0.0
    %2361 = vmatpush2.msra.mxu0 0.0
    %2362 = vmatprep.subr.mxu0 0.0
    %2363 = vmatpush2.msra.mxu0 0.0
    %2364 = vmatprep.subr.mxu0 0.0
    %2365 = vmatpush2.msra.mxu0 0.0
    %2366 = vmatprep.subr.mxu0 0.0
    %2367 = vmatpush2.msra.mxu0 0.0
    %2368 = vmatprep.subr.mxu0 0.0
    %2369 = vmatpush2.msra.mxu0 0.0
    %2370 = vmatprep.subr.mxu0 0.0
    %2371 = vmatpush2.msra.mxu0 0.0
    %2372 = vmatprep.subr.mxu0 0.0
    %2373 = vmatpush2.msra.mxu0 0.0
    %2374 = vmatprep.subr.mxu0 0.0
    %2375 = vmatpush2.msra.mxu0 0.0
    %2376 = vmatprep.subr.mxu0 0.0
    %2377 = vmatpush2.msra.mxu0 0.0
    %2378 = vmatprep.subr.mxu0 0.0
    %2379 = vmatpush2.msra.mxu0 0.0
    %2380 = vmatprep.subr.mxu0 0.0
    %2381 = vmatpush2.msra.mxu0 0.0
    %2382 = vmatprep.subr.mxu0 0.0
    %2383 = vmatpush2.msra.mxu0 0.0
    %2384 = vmatprep.mubr.f32.mxu0 0.0
    %2385 = vmatmul.mubr.f32.gmra.mxu0 %v2318
    %v2386 = vpop.f32.mrf.mxu0
    %v2387 = vadd.f32 0.0, %v2386
    %v2388 = vpop.f32.mrf.mxu0
    %2389 = vmatprep.mubr.f32.mxu0 0.0
    %2390 = vmatmul.mubr.f32.gmra.mxu0 %v2319
    %v2391 = vpop.f32.mrf.mxu0
    %v2392 = vadd.f32 0.0, %v2391
    %v2393 = vpop.f32.mrf.mxu0
    %2394 = vdwg.mxu0
    %v2395 = vlaneseq
    %v2396 = vshrl.u32 %v2395, 7
    %v2397 = vsub.s32 0, %v2396
    %v2398 = vrot.slane %v181, %v2397
    %v2400 = vsel %vm392, %v2387, 0
    %v2403 = vsel %vm392, %v2392, 0
    %2405 = vmatprep.subr.mxu0 0.0
    %2406 = vmatpush1.msra.mxu0 0.0
    %2407 = vmatprep.subr.mxu0 0.0
    %2408 = vmatpush1.msra.mxu0 0.0
    %2409 = vmatprep.subr.mxu0 0.0
    %2410 = vmatpush1.msra.mxu0 0.0
    %2411 = vmatprep.subr.mxu0 0.0
    %2412 = vmatpush1.msra.mxu0 0.0
    %2413 = vmatprep.subr.mxu0 0.0
    %2414 = vmatpush1.msra.mxu0 0.0
    %2415 = vmatprep.subr.mxu0 0.0
    %2416 = vmatpush1.msra.mxu0 0.0
    %2417 = vmatprep.subr.mxu0 0.0
    %2418 = vmatpush1.msra.mxu0 0.0
    %2419 = vmatprep.subr.mxu0 0.0
    %2420 = vmatpush1.msra.mxu0 0.0
    %2421 = vmatprep.subr.mxu0 0.0
    %2422 = vmatpush1.msra.mxu0 0.0
    %2423 = vmatprep.subr.mxu0 0.0
    %2424 = vmatpush1.msra.mxu0 0.0
    %2425 = vmatprep.subr.mxu0 0.0
    %2426 = vmatpush1.msra.mxu0 0.0
    %2427 = vmatprep.subr.mxu0 0.0
    %2428 = vmatpush1.msra.mxu0 0.0
    %2429 = vmatprep.subr.mxu0 0.0
    %2430 = vmatpush1.msra.mxu0 %v147
    %2431 = vmatprep.subr.mxu0 0.0
    %2432 = vmatpush1.msra.mxu0 %v146
    %2433 = vmatprep.subr.mxu0 0.0
    %2434 = vmatpush1.msra.mxu0 %v145
    %2435 = vmatprep.subr.mxu0 0.0
    %2436 = vmatpush1.msra.mxu0 %v144
    %2437 = vmatprep.subr.mxu0 0.0
    %2438 = vmatpush2.msra.mxu0 0.0
    %2439 = vmatprep.subr.mxu0 0.0
    %2440 = vmatpush2.msra.mxu0 0.0
    %2441 = vmatprep.subr.mxu0 0.0
    %2442 = vmatpush2.msra.mxu0 0.0
    %2443 = vmatprep.subr.mxu0 0.0
    %2444 = vmatpush2.msra.mxu0 0.0
    %2445 = vmatprep.subr.mxu0 0.0
    %2446 = vmatpush2.msra.mxu0 0.0
    %2447 = vmatprep.subr.mxu0 0.0
    %2448 = vmatpush2.msra.mxu0 0.0
    %2449 = vmatprep.subr.mxu0 0.0
    %2450 = vmatpush2.msra.mxu0 0.0
    %2451 = vmatprep.subr.mxu0 0.0
    %2452 = vmatpush2.msra.mxu0 0.0
    %2453 = vmatprep.subr.mxu0 0.0
    %2454 = vmatpush2.msra.mxu0 0.0
    %2455 = vmatprep.subr.mxu0 0.0
    %2456 = vmatpush2.msra.mxu0 0.0
    %2457 = vmatprep.subr.mxu0 0.0
    %2458 = vmatpush2.msra.mxu0 0.0
    %2459 = vmatprep.subr.mxu0 0.0
    %2460 = vmatpush2.msra.mxu0 0.0
    %2461 = vmatprep.subr.mxu0 0.0
    %2462 = vmatpush2.msra.mxu0 0.0
    %2463 = vmatprep.subr.mxu0 0.0
    %2464 = vmatpush2.msra.mxu0 0.0
    %2465 = vmatprep.subr.mxu0 0.0
    %2466 = vmatpush2.msra.mxu0 0.0
    %2467 = vmatprep.subr.mxu0 0.0
    %2468 = vmatpush2.msra.mxu0 0.0
    %2469 = vmatprep.mubr.f32.mxu0 0.0
    %2470 = vmatmul.mubr.f32.gmra.mxu0 %v2400
    %v2471 = vpop.f32.mrf.mxu0
    %v2472 = vadd.f32 %v2398, %v2471
    %v2473 = vpop.f32.mrf.mxu0
    %2474 = vmatprep.mubr.f32.mxu0 0.0
    %2475 = vmatmul.mubr.f32.gmra.mxu0 %v2403
    %v2476 = vpop.f32.mrf.mxu0
    %v2477 = vadd.f32 %v2398, %v2476
    %v2478 = vpop.f32.mrf.mxu0
    %2479 = vdwg.mxu0
    %2480 = vst [vmem:[%s6] sm:$0xff] %v2472
    %2481 = vst [vmem:[%s6 + $0x8] sm:$0xff] %v2477
    // Predicated region
    $region38: #{_forward_impl.1} parent=1 // pred_check
      _
    $region39: #{_forward_impl.1} parent=1 // pred_check_branch
      %2483 = sbr.rel (0) target = $region41
    $region40: #{_forward_impl.1} parent=1 // pred_region
      _
    $region41: #{_forward_impl.1} parent=1 // pred_fallthru
      _
    // Predicated region
    $region42: #{_forward_impl.1} parent=1 // pred_check
      _
    $region43: #{_forward_impl.1} parent=1 // pred_check_branch
      %2485 = sbr.rel (0) target = $region45
    $region44: #{_forward_impl.1} parent=1 // pred_region
      _
    $region45: #{_forward_impl.1} parent=1 // pred_fallthru
      _
    %2486 = vsyncpa [#allocation3], 1
    %2487 = vsyncpa [#allocation5], 1

</llo_original>
